<compile_context>
chip_gen: v7x
topology: tpu7x:2x2x1
jax: 0.10.0
libtpu: 0.0.40
codegen_flags: <defaults>
</compile_context>

<pallas_src>
from functools import partial

import jax
import jax.numpy as jnp
from jax.experimental import pallas as pl
from jax.experimental.pallas import tpu as pltpu


_VMEM_LIMIT = 32 * 1024 * 1024   # explicit scoped-VMEM budget, safe on v5e/v6e/v7x


# ---------------------------------------------------------------------------
# small helpers
# ---------------------------------------------------------------------------
def _rup(x, m):
    return ((x + m - 1) // m) * m


def _pick_tile(dim, tmax):
    t = min(dim, tmax)
    while dim % t != 0:
        t //= 2
    return t


def _pad_last(a, target):
    c = a.shape[-1]
    if c == target:
        return a
    pad = [(0, 0)] * (a.ndim - 1) + [(0, target - c)]
    return jnp.pad(a, pad)


# ---------------------------------------------------------------------------
# fused conv1 + bn1 + relu + conv2a + bn2a  (two chained 1x1x1 convs)
# ---------------------------------------------------------------------------
def _mm2_kernel(x_ref, w1_ref, s1_ref, w2_ref, s2_ref, o_ref, acc_ref):
    k = pl.program_id(1)

    @pl.when(k == 0)
    def _():
        acc_ref[...] = jnp.zeros_like(acc_ref)

    acc_ref[...] += jnp.dot(x_ref[...], w1_ref[...],
                            preferred_element_type=jnp.float32)

    @pl.when(k == pl.num_programs(1) - 1)
    def _():
        # bn1 shift + ReLU, cast to bf16, then the second pointwise matmul
        # (planes x planes) and bn2a shift -- all in the epilogue.
        h = jnp.maximum(acc_ref[...] + s1_ref[...], 0.0).astype(jnp.bfloat16)
        out = jnp.dot(h, w2_ref[...], preferred_element_type=jnp.float32)
        o_ref[...] = (out + s2_ref[...]).astype(o_ref.dtype)


def fused_double_pointwise(x, w1, s1, w2, s2, *, out_dtype=jnp.bfloat16,
                           tm=512, tk_max=512):
    """relu(x @ w1 + s1) @ w2 + s2 in one kernel (BN scales pre-folded).

    x: (M, K) bf16, K multiple of 128.  w1: (K, Nmid) bf16.  w2: (Nmid, Nmid)
    bf16.  s1, s2: (1, Nmid) f32.  Nmid is kept un-tiled so the second matmul
    sees the full contraction (Nmid <= ~2048 fits VMEM comfortably).
    """
    m, kdim = x.shape
    nmid = w1.shape[1]
    tm = min(tm, _rup(m, 8))
    m_pad = _rup(m, tm)
    if m_pad != m:
        x = jnp.pad(x, ((0, m_pad - m), (0, 0)))
    tk = _pick_tile(kdim, tk_max)
    grid = (m_pad // tm, kdim // tk)

    out = pl.pallas_call(
        _mm2_kernel,
        out_shape=jax.ShapeDtypeStruct((m_pad, nmid), out_dtype),
        grid=grid,
        in_specs=[
            pl.BlockSpec((tm, tk), lambda i, k: (i, k)),
            pl.BlockSpec((tk, nmid), lambda i, k: (k, 0)),
            pl.BlockSpec((1, nmid), lambda i, k: (0, 0)),
            pl.BlockSpec((nmid, nmid), lambda i, k: (0, 0)),
            pl.BlockSpec((1, nmid), lambda i, k: (0, 0)),
        ],
        out_specs=pl.BlockSpec((tm, nmid), lambda i, k: (i, 0)),
        scratch_shapes=[pltpu.VMEM((tm, nmid), jnp.float32)],
        compiler_params=pltpu.CompilerParams(
            dimension_semantics=("parallel", "arbitrary"),
            vmem_limit_bytes=_VMEM_LIMIT),
    )(x, w1, s1, w2, s2)
    return out[:m] if m_pad != m else out


# ---------------------------------------------------------------------------
# pointwise (1x1x1) conv kernels: tiled matmul + shift (+ residual) (+ relu)
# BN scale is pre-folded into the weights; only the shift remains here.
# ---------------------------------------------------------------------------
def _mm_kernel(x_ref, w_ref, s_ref, o_ref, acc_ref, *, relu):
    @pl.when(pl.program_id(2) == 0)
    def _():
        acc_ref[...] = jnp.zeros_like(acc_ref)

    acc_ref[...] += jnp.dot(x_ref[...], w_ref[...],
                            preferred_element_type=jnp.float32)

    @pl.when(pl.program_id(2) == pl.num_programs(2) - 1)
    def _():
        out = acc_ref[...] + s_ref[...]
        if relu:
            out = jnp.maximum(out, 0.0)
        o_ref[...] = out.astype(o_ref.dtype)


def _mm_res_kernel(x_ref, w_ref, s_ref, r_ref, o_ref, acc_ref, *, relu):
    # identity-residual variant: residual tile added in f32 before the ReLU
    @pl.when(pl.program_id(2) == 0)
    def _():
        acc_ref[...] = jnp.zeros_like(acc_ref)

    acc_ref[...] += jnp.dot(x_ref[...], w_ref[...],
                            preferred_element_type=jnp.float32)

    @pl.when(pl.program_id(2) == pl.num_programs(2) - 1)
    def _():
        out = acc_ref[...] + s_ref[...] + r_ref[...].astype(jnp.float32)
        if relu:
            out = jnp.maximum(out, 0.0)
        o_ref[...] = out.astype(o_ref.dtype)


def _mm_fused_shortcut_kernel(x_ref, w_ref, s_ref, xs_ref, ws_ref, o_ref,
                              acc_ref, *, relu):
    # conv3 + bn3 fused with the projection-shortcut conv + bn; the shortcut
    # matmul seeds the accumulator at k == 0, the main matmul is K-tiled.
    k = pl.program_id(2)

    @pl.when(k == 0)
    def _():
        acc_ref[...] = jnp.dot(xs_ref[...], ws_ref[...],
                               preferred_element_type=jnp.float32)

    acc_ref[...] += jnp.dot(x_ref[...], w_ref[...],
                            preferred_element_type=jnp.float32)

    @pl.when(k == pl.num_programs(2) - 1)
    def _():
        out = acc_ref[...] + s_ref[...]
        if relu:
            out = jnp.maximum(out, 0.0)
        o_ref[...] = out.astype(o_ref.dtype)


def pointwise_conv(x, w, shift, *, relu, residual=None, shortcut=None,
                   out_dtype=jnp.bfloat16, tm=512, tn_max=256, tk_max=512):
    """1x1x1 conv as an M-N-K tiled bf16 matmul with fused BN shift/ReLU.

    x: (M, K) bf16, K multiple of 128.   w: (K, N) bf16, BN scale pre-folded.
    shift: (1, N) f32.
    residual: optional (M, N) tensor added before the ReLU (identity path).
    shortcut: optional (xs, ws): a second matmul fused into the same kernel
        (projection shortcut); its BN shift must already be merged into shift.
    """
    m, kdim = x.shape
    ndim = w.shape[1]
    tm = min(tm, _rup(m, 8))
    m_pad = _rup(m, tm)
    if m_pad != m:
        x = jnp.pad(x, ((0, m_pad - m), (0, 0)))
        if residual is not None:
            residual = jnp.pad(residual, ((0, m_pad - m), (0, 0)))
        if shortcut is not None:
            xs, ws = shortcut
            shortcut = (jnp.pad(xs, ((0, m_pad - m), (0, 0))), ws)
    tk = _pick_tile(kdim, tk_max)
    tn = _pick_tile(ndim, tn_max)
    grid = (m_pad // tm, ndim // tn, kdim // tk)

    in_specs = [
        pl.BlockSpec((tm, tk), lambda i, j, k: (i, k)),
        pl.BlockSpec((tk, tn), lambda i, j, k: (k, j)),
        pl.BlockSpec((1, tn), lambda i, j, k: (0, j)),
    ]
    args = [x, w, shift]
    if shortcut is not None:
        xs, ws = shortcut
        k2 = xs.shape[1]
        in_specs += [
            pl.BlockSpec((tm, k2), lambda i, j, k: (i, 0)),
            pl.BlockSpec((k2, tn), lambda i, j, k: (0, j)),
        ]
        args += [xs, ws]
        kernel = partial(_mm_fused_shortcut_kernel, relu=relu)
    elif residual is not None:
        in_specs.append(pl.BlockSpec((tm, tn), lambda i, j, k: (i, j)))
        args.append(residual)
        kernel = partial(_mm_res_kernel, relu=relu)
    else:
        kernel = partial(_mm_kernel, relu=relu)

    out = pl.pallas_call(
        kernel,
        out_shape=jax.ShapeDtypeStruct((m_pad, ndim), out_dtype),
        grid=grid,
        in_specs=in_specs,
        out_specs=pl.BlockSpec((tm, tn), lambda i, j, k: (i, j)),
        scratch_shapes=[pltpu.VMEM((tm, tn), jnp.float32)],
        compiler_params=pltpu.CompilerParams(
            dimension_semantics=("parallel", "parallel", "arbitrary"),
            vmem_limit_bytes=_VMEM_LIMIT),
    )(*args)
    return out[:m] if m_pad != m else out


# ---------------------------------------------------------------------------
# depthwise 3x3x3 conv (groups=C) + folded BN + ReLU, tiled over depth slabs
# ---------------------------------------------------------------------------
def _dw_kernel(x_hbm, w_ref, s_ref, o_ref, xbuf, sem, *, stride, dt, dt_in,
               out_hw):
    sd, sh, sw = stride
    ho, wo = out_hw
    b = pl.program_id(0)
    j = pl.program_id(1)
    d_start = j * (dt * sd)

    # DMA this sample's depth slab (+ halo) from HBM into VMEM.
    cp = pltpu.make_async_copy(x_hbm.at[b, pl.ds(d_start, dt_in)], xbuf,
                               sem.at[0])
    cp.start()
    cp.wait()

    x = xbuf[...]
    c = x.shape[-1]
    # Seed the accumulator with the folded BN shift; 27-tap stencil stays in
    # vregs, only the fused BN+ReLU result is stored once (lane-dense, C>=128).
    acc = jnp.broadcast_to(s_ref[...], (dt, ho, wo, c)).astype(jnp.float32)
    for kd in range(3):
        for kh in range(3):
            for kw in range(3):
                patch = x[kd:kd + (dt - 1) * sd + 1:sd,
                          kh:kh + (ho - 1) * sh + 1:sh,
                          kw:kw + (wo - 1) * sw + 1:sw, :]
                kk = kd * 9 + kh * 3 + kw
                acc = acc + patch.astype(jnp.float32) * w_ref[kk:kk + 1, :]
    o_ref[0] = jnp.maximum(acc, 0.0).astype(o_ref.dtype)


def depthwise_conv3_bn_relu(x, w27, shift, *, stride, dt_max=4):
    """Depthwise 3x3x3 conv (padding=1, groups=C) + folded BN + ReLU.

    x: (N, D, H, W, C) bf16, C multiple of 128.
    w27: (27, C) f32 taps (kd*9+kh*3+kw, channel) with the BN scale folded in.
    shift: (1, C) f32.
    Tiled over (batch, depth-slabs): only O(slab) VMEM is resident (needed for
    v7x's 64 MiB VMEM), the padded activation stays in HBM.
    """
    # TODO(synk): per-slab input DMA is serialized with compute; a P4 double
    # buffer across grid steps would hide it but needs a deterministic
    # traversal order (would give up megacore batch parallelism).
    n, d, h, w, c = x.shape
    sd, sh, sw = stride
    do = (d - 1) // sd + 1
    ho = (h - 1) // sh + 1
    wo = (w - 1) // sw + 1
    dt = min(dt_max, do)
    nslab = (do + dt - 1) // dt
    do_pad = nslab * dt
    dt_in = (dt - 1) * sd + 3
    # conv zero-padding (1 each side); pad D a bit more so the last (possibly
    # partial) slab's halo DMA stays in bounds.
    dp_needed = (do_pad - 1) * sd + 3
    pad_d_hi = 1 + max(0, dp_needed - (d + 2))
    xp = jnp.pad(x, ((0, 0), (1, pad_d_hi), (1, 1), (1, 1), (0, 0)))
    hp, wp = h + 2, w + 2

    kernel = partial(_dw_kernel, stride=(sd, sh, sw), dt=dt, dt_in=dt_in,
                     out_hw=(ho, wo))
    out = pl.pallas_call(
        kernel,
        out_shape=jax.ShapeDtypeStruct((n, do_pad, ho, wo, c), x.dtype),
        grid=(n, nslab),
        in_specs=[
            pl.BlockSpec(memory_space=pl.ANY),           # padded input in HBM
            pl.BlockSpec((27, c), lambda b, j: (0, 0)),
            pl.BlockSpec((1, c), lambda b, j: (0, 0)),
        ],
        out_specs=pl.BlockSpec((1, dt, ho, wo, c), lambda b, j: (b, j, 0, 0, 0)),
        scratch_shapes=[
            pltpu.VMEM((dt_in, hp, wp, c), x.dtype),
            pltpu.SemaphoreType.DMA((1,)),
        ],
        compiler_params=pltpu.CompilerParams(
            dimension_semantics=("parallel", "arbitrary"),
            vmem_limit_bytes=_VMEM_LIMIT),
    )(xp, w27, shift)
    return out[:, :do] if do_pad != do else out


# ---------------------------------------------------------------------------
# parameters (deterministic, synthetic) + forward pass
# ---------------------------------------------------------------------------
def _fold_bn(gamma, beta, mean, var, eps=1e-5):
    scale = gamma / jnp.sqrt(var + eps)
    shift = beta - mean * scale
    return scale, shift


def init_params(key, inplanes, planes):
    def bn_params(k, c):
        kg, kb, km, kv = jax.random.split(k, 4)
        gamma = 1.0 + 0.1 * jax.random.normal(kg, (c,), jnp.float32)
        beta = 0.1 * jax.random.normal(kb, (c,), jnp.float32)
        mean = 0.1 * jax.random.normal(km, (c,), jnp.float32)
        var = jax.random.uniform(kv, (c,), jnp.float32, 0.5, 1.5)
        return _fold_bn(gamma, beta, mean, var)

    keys = jax.random.split(key, 10)
    p = {}
    # conv1: Conv3d(inplanes, planes, 1) -> matmul weight (inplanes, planes)
    p["w1"] = 0.1 * jax.random.normal(keys[0], (inplanes, planes), jnp.float32)
    p["bn1"] = bn_params(keys[1], planes)
    # conv2 ('ip'): pointwise + BN + depthwise 3x3x3 (groups=planes)
    p["w2a"] = 0.1 * jax.random.normal(keys[2], (planes, planes), jnp.float32)
    p["bn2a"] = bn_params(keys[3], planes)
    p["w2dw"] = 0.1 * jax.random.normal(keys[4], (3, 3, 3, planes), jnp.float32)
    p["bn2"] = bn_params(keys[5], planes)
    # conv3: Conv3d(planes, planes*4, 1)
    p["w3"] = 0.1 * jax.random.normal(keys[6], (planes, planes * 4), jnp.float32)
    p["bn3"] = bn_params(keys[7], planes * 4)
    # projection shortcut only when inplanes != planes*4 (as in PyTorch)
    if inplanes != planes * 4:
        p["ws"] = 0.1 * jax.random.normal(keys[8], (inplanes, planes * 4),
                                          jnp.float32)
        p["bns"] = bn_params(keys[9], planes * 4)
    return p


def bottleneck_forward(x_ncdhw, params, *, stride=(1, 1, 1), dw_dt_max=4):
    # NCDHW -> NDHWC (channels on the lane dim)
    x = jnp.transpose(x_ncdhw, (0, 2, 3, 4, 1))
    n, d, h, w, cin = x.shape
    planes = params["w1"].shape[1]
    cout = planes * 4

    cin_p = _rup(cin, 128)
    mid_p = _rup(planes, 128)
    cout_p = _rup(cout, 128)

    def prep_w(wmat, scale, kp, np_):
        # fold BN scale into the weight, zero-pad to lane-dense shape, cast bf16
        wmat = wmat * scale[None, :]
        wmat = jnp.pad(wmat, ((0, kp - wmat.shape[0]), (0, np_ - wmat.shape[1])))
        return wmat.astype(jnp.bfloat16)

    def prep_shift(sh, np_):
        return jnp.pad(sh, (0, np_ - sh.shape[0])).reshape(1, np_).astype(jnp.float32)

    # bf16 activations, channel-padded (zeros in the padded lanes stay zero
    # through every layer because padded weight rows/cols and shifts are zero).
    xb = _pad_last(x.astype(jnp.bfloat16), cin_p)
    x_flat = xb.reshape(-1, cin_p)

    # conv1 + bn1 + relu + conv2a + bn2a (the 'ip' pointwise) fused in one
    # kernel: the (M, planes) intermediate never touches HBM.
    s1, b1 = params["bn1"]
    s2a, b2a = params["bn2a"]
    out = fused_double_pointwise(
        x_flat,
        prep_w(params["w1"], s1, cin_p, mid_p), prep_shift(b1, mid_p),
        prep_w(params["w2a"], s2a, mid_p, mid_p), prep_shift(b2a, mid_p))
    out = out.reshape(n, d, h, w, mid_p)

    # depthwise 3x3x3 (groups=planes) + bn2 + relu
    s2, b2 = params["bn2"]
    w_dw = (params["w2dw"] * s2).reshape(27, planes)        # fold BN scale into taps
    w_dw = _pad_last(w_dw, mid_p).astype(jnp.float32)
    out = depthwise_conv3_bn_relu(out, w_dw, prep_shift(b2, mid_p),
                                  stride=stride, dt_max=dw_dt_max)
    _, do, ho, wo, _ = out.shape

    # strided input for the residual branch (no separate residual kernel)
    xs = xb[:, ::stride[0], ::stride[1], ::stride[2], :].reshape(-1, cin_p)

    # conv3 (1x1x1) + bn3 + residual + relu, fused in one kernel
    s3, b3 = params["bn3"]
    w3 = prep_w(params["w3"], s3, mid_p, cout_p)
    if "ws" in params:
        ss, bs = params["bns"]
        ws = prep_w(params["ws"], ss, cin_p, cout_p)
        out = pointwise_conv(out.reshape(-1, mid_p), w3,
                             prep_shift(b3 + bs, cout_p), relu=True,
                             shortcut=(xs, ws), out_dtype=jnp.float32)
    else:
        out = pointwise_conv(out.reshape(-1, mid_p), w3,
                             prep_shift(b3, cout_p), relu=True,
                             residual=xs, out_dtype=jnp.float32)

    out = out.reshape(n, do, ho, wo, cout_p)[..., :cout]
    return jnp.transpose(out, (0, 4, 1, 2, 3))


# ---------------------------------------------------------------------------
# pure-JAX f32 reference (for numerical validation)
# ---------------------------------------------------------------------------
def bottleneck_reference(x_ncdhw, params, *, stride=(1, 1, 1)):
    x = jnp.transpose(x_ncdhw, (0, 2, 3, 4, 1)).astype(jnp.float32)
    n, d, h, w, cin = x.shape
    planes = params["w1"].shape[1]
    sd, sh, sw = stride

    def pw(t, wmat, bn, relu):
        s, b = bn
        y = t @ wmat * s + b
        return jnp.maximum(y, 0.0) if relu else y

    o = pw(x.reshape(-1, cin), params["w1"], params["bn1"], True)
    o = pw(o, params["w2a"], params["bn2a"], False)
    o = o.reshape(n, d, h, w, planes)

    do = (d - 1) // sd + 1
    ho = (h - 1) // sh + 1
    wo = (w - 1) // sw + 1
    xp = jnp.pad(o, ((0, 0), (1, 1), (1, 1), (1, 1), (0, 0)))
    acc = jnp.zeros((n, do, ho, wo, planes), jnp.float32)
    for kd in range(3):
        for kh in range(3):
            for kw in range(3):
                patch = xp[:, kd:kd + (do - 1) * sd + 1:sd,
                           kh:kh + (ho - 1) * sh + 1:sh,
                           kw:kw + (wo - 1) * sw + 1:sw, :]
                acc = acc + patch * params["w2dw"][kd, kh, kw]
    s2, b2 = params["bn2"]
    o = jnp.maximum(acc * s2 + b2, 0.0).reshape(-1, planes)

    o = pw(o, params["w3"], params["bn3"], False)
    xs = x[:, ::sd, ::sh, ::sw, :].reshape(-1, cin)
    res = pw(xs, params["ws"], params["bns"], False) if "ws" in params else xs
    o = jnp.maximum(o + res, 0.0).reshape(n, do, ho, wo, planes * 4)
    return jnp.transpose(o, (0, 4, 1, 2, 3))


# ---------------------------------------------------------------------------
# main
# ---------------------------------------------------------------------------
def _run_case(key, *, inplanes, planes, shape, stride, dw_dt_max):
    kx, kp = jax.random.split(key)
    n, d, h, w = shape
    x = jax.random.normal(kx, (n, inplanes, d, h, w), jnp.float32)
    params = init_params(kp, inplanes, planes)
    out = jax.block_until_ready(
        bottleneck_forward(x, params, stride=stride, dw_dt_max=dw_dt_max))
    do = (d - 1) // stride[0] + 1
    ho = (h - 1) // stride[1] + 1
    wo = (w - 1) // stride[2] + 1
    assert out.shape == (n, planes * 4, do, ho, wo), out.shape
    assert bool(jnp.all(jnp.isfinite(out)))
    assert bool(jnp.all(out >= 0.0))           # final ReLU
    ref = bottleneck_reference(x, params, stride=stride)
    err = float(jnp.max(jnp.abs(out - ref)))
    tol = 0.1 * max(1.0, float(jnp.max(jnp.abs(ref))))   # bf16 matmul tolerance
    assert err <= tol, (err, tol)
    return out


if __name__ == "__main__":
    key = jax.random.PRNGKey(0)
    k1, k2 = jax.random.split(key)
    # projection-shortcut path (inplanes != planes*4), two depth slabs
    _run_case(k1, inplanes=8, planes=4, shape=(2, 4, 8, 8),
              stride=(1, 1, 1), dw_dt_max=2)
    # identity-residual path (inplanes == planes*4), non-divisible depth slabs
    _run_case(k2, inplanes=16, planes=4, shape=(1, 5, 8, 8),
              stride=(1, 1, 1), dw_dt_max=4)
    print("KERNEL_OK")
</pallas_src>

<mosaic_0001>
module attributes {stable_mosaic.version = 11 : i64} {
  func.func @_mm2_kernel(%arg0: i32, %arg1: i32, %arg2: memref<512x128xbf16, #tpu.memory_space<vmem>>, %arg3: memref<128x128xbf16, #tpu.memory_space<vmem>>, %arg4: memref<1x128xf32, #tpu.memory_space<vmem>>, %arg5: memref<128x128xbf16, #tpu.memory_space<vmem>>, %arg6: memref<1x128xf32, #tpu.memory_space<vmem>>, %arg7: memref<512x128xbf16, #tpu.memory_space<vmem>>, %arg8: memref<512x128xf32, #tpu.memory_space<vmem>>) attributes {dimension_semantics = [#tpu.dimension_semantics<parallel>, #tpu.dimension_semantics<arbitrary>], iteration_bounds = array<i64: 1, 1>, scalar_prefetch = 0 : i64, scratch_operands = 1 : i64, tpu.core_type = #tpu.core_type<tc>, window_params = [{transform_indices = @transform_0, window_bounds = array<i64: 512, 128>}, {transform_indices = @transform_1, window_bounds = array<i64: 128, 128>}, {pipeline_mode = #tpu.pipeline_mode<synchronous>, transform_indices = @transform_2, window_bounds = array<i64: 1, 128>}, {pipeline_mode = #tpu.pipeline_mode<synchronous>, transform_indices = @transform_3, window_bounds = array<i64: 128, 128>}, {pipeline_mode = #tpu.pipeline_mode<synchronous>, transform_indices = @transform_4, window_bounds = array<i64: 1, 128>}, {transform_indices = @transform_5, window_bounds = array<i64: 512, 128>}]} {
    %c0_i32 = arith.constant 0 : i32
    %0 = arith.cmpi eq, %arg1, %c0_i32 : i32
    %1 = arith.extui %0 : i1 to i32
    %c0_i32_0 = arith.constant 0 : i32
    %2 = arith.cmpi ne, %1, %c0_i32_0 : i32
    scf.if %2 {
      %cst_10 = arith.constant 0.000000e+00 : f32
      %12 = vector.broadcast %cst_10 : f32 to vector<512x128xf32>
      %c0_11 = arith.constant 0 : index
      %c0_12 = arith.constant 0 : index
      %13 = vector.load %arg8[%c0_11, %c0_12] : memref<512x128xf32, #tpu.memory_space<vmem>>, vector<512x128xf32>
      tpu.vector_store %arg8[%c0_11, %c0_12], %12 {strides = array<i32>} : memref<512x128xf32, #tpu.memory_space<vmem>>, vector<512x128xf32>,
    } else {
    }
    %c0 = arith.constant 0 : index
    %c0_1 = arith.constant 0 : index
    %3 = vector.load %arg8[%c0, %c0_1] : memref<512x128xf32, #tpu.memory_space<vmem>>, vector<512x128xf32>
    %c0_2 = arith.constant 0 : index
    %c0_3 = arith.constant 0 : index
    %4 = vector.load %arg2[%c0_2, %c0_3] : memref<512x128xbf16, #tpu.memory_space<vmem>>, vector<512x128xbf16>
    %c0_4 = arith.constant 0 : index
    %c0_5 = arith.constant 0 : index
    %5 = vector.load %arg3[%c0_4, %c0_5] : memref<128x128xbf16, #tpu.memory_space<vmem>>, vector<128x128xbf16>
    %cst = arith.constant dense<0.000000e+00> : vector<512x128xf32>
    %6 = tpu.matmul %4, %5, %cst {dimension_numbers = #tpu.dot_dimension_numbers<[1], [0], [0], [1], [0, 0, 1, 1], [], []>} : vector<512x128xbf16>, vector<128x128xbf16>, vector<512x128xf32> -> vector<512x128xf32>
    %7 = arith.addf %3, %6 : vector<512x128xf32>
    %c0_6 = arith.constant 0 : index
    %c0_7 = arith.constant 0 : index
    %8 = vector.load %arg8[%c0_6, %c0_7] : memref<512x128xf32, #tpu.memory_space<vmem>>, vector<512x128xf32>
    tpu.vector_store %arg8[%c0_6, %c0_7], %7 {strides = array<i32>} : memref<512x128xf32, #tpu.memory_space<vmem>>, vector<512x128xf32>,
    %c0_i32_8 = arith.constant 0 : i32
    %9 = arith.cmpi eq, %arg1, %c0_i32_8 : i32
    %10 = arith.extui %9 : i1 to i32
    %c0_i32_9 = arith.constant 0 : i32
    %11 = arith.cmpi ne, %10, %c0_i32_9 : i32
    scf.if %11 {
      %c0_10 = arith.constant 0 : index
      %c0_11 = arith.constant 0 : index
      %12 = vector.load %arg8[%c0_10, %c0_11] : memref<512x128xf32, #tpu.memory_space<vmem>>, vector<512x128xf32>
      %c0_12 = arith.constant 0 : index
      %c0_13 = arith.constant 0 : index
      %13 = vector.load %arg4[%c0_12, %c0_13] : memref<1x128xf32, #tpu.memory_space<vmem>>, vector<1x128xf32>
      %14 = vector.broadcast %13 : vector<1x128xf32> to vector<512x128xf32>
      %15 = arith.addf %12, %14 : vector<512x128xf32>
      %cst_14 = arith.constant 0.000000e+00 : f32
      %16 = vector.broadcast %cst_14 : f32 to vector<512x128xf32>
      %17 = arith.maximumf %15, %16 : vector<512x128xf32>
      %18 = arith.truncf %17 : vector<512x128xf32> to vector<512x128xbf16>
      %c0_15 = arith.constant 0 : index
      %c0_16 = arith.constant 0 : index
      %19 = vector.load %arg5[%c0_15, %c0_16] : memref<128x128xbf16, #tpu.memory_space<vmem>>, vector<128x128xbf16>
      %cst_17 = arith.constant dense<0.000000e+00> : vector<512x128xf32>
      %20 = tpu.matmul %18, %19, %cst_17 {dimension_numbers = #tpu.dot_dimension_numbers<[1], [0], [0], [1], [0, 0, 1, 1], [], []>} : vector<512x128xbf16>, vector<128x128xbf16>, vector<512x128xf32> -> vector<512x128xf32>
      %c0_18 = arith.constant 0 : index
      %c0_19 = arith.constant 0 : index
      %21 = vector.load %arg6[%c0_18, %c0_19] : memref<1x128xf32, #tpu.memory_space<vmem>>, vector<1x128xf32>
      %22 = vector.broadcast %21 : vector<1x128xf32> to vector<512x128xf32>
      %23 = arith.addf %20, %22 : vector<512x128xf32>
      %24 = arith.truncf %23 : vector<512x128xf32> to vector<512x128xbf16>
      %c0_20 = arith.constant 0 : index
      %c0_21 = arith.constant 0 : index
      %25 = vector.load %arg7[%c0_20, %c0_21] : memref<512x128xbf16, #tpu.memory_space<vmem>>, vector<512x128xbf16>
      tpu.vector_store %arg7[%c0_20, %c0_21], %24 {strides = array<i32>} : memref<512x128xbf16, #tpu.memory_space<vmem>>, vector<512x128xbf16>,
    } else {
    }
    return
  }
  func.func @transform_0(%arg0: i32, %arg1: i32) -> (i32, i32) {
    %c0_i32 = arith.constant 0 : i32
    return %arg0, %arg1 : i32, i32
  }
  func.func @transform_1(%arg0: i32, %arg1: i32) -> (i32, i32) {
    %c0_i32 = arith.constant 0 : i32
    %c0_i32_0 = arith.constant 0 : i32
    return %arg1, %c0_i32 : i32, i32
  }
  func.func @transform_2(%arg0: i32, %arg1: i32) -> (i32, i32) {
    %c0_i32 = arith.constant 0 : i32
    %c0_i32_0 = arith.constant 0 : i32
    %c0_i32_1 = arith.constant 0 : i32
    return %c0_i32, %c0_i32_0 : i32, i32
  }
  func.func @transform_3(%arg0: i32, %arg1: i32) -> (i32, i32) {
    %c0_i32 = arith.constant 0 : i32
    %c0_i32_0 = arith.constant 0 : i32
    %c0_i32_1 = arith.constant 0 : i32
    return %c0_i32, %c0_i32_0 : i32, i32
  }
  func.func @transform_4(%arg0: i32, %arg1: i32) -> (i32, i32) {
    %c0_i32 = arith.constant 0 : i32
    %c0_i32_0 = arith.constant 0 : i32
    %c0_i32_1 = arith.constant 0 : i32
    return %c0_i32, %c0_i32_0 : i32, i32
  }
  func.func @transform_5(%arg0: i32, %arg1: i32) -> (i32, i32) {
    %c0_i32 = arith.constant 0 : i32
    %c0_i32_0 = arith.constant 0 : i32
    return %arg0, %c0_i32 : i32, i32
  }
}

</mosaic_0001>

<llo_original>
// kernel: tpu_custom_call.1
$region0: #{tpu_custom_call.1}
  #allocation0 [shape = 'u32[]', space=smem, size = 0x4, offset = 0x4, fixed_abs, tag = 'smem constant byte address 0x4 - core index']
  #allocation1 [shape = 'u32[144,128]{1,0:T(1,128)}', space=vmem, size = 0x12000, scoped, tag = 'internal scratch']
  #allocation2 [shape = 'f32[512,128]{1,0:T(8,128)}', space=vmem, size = 0x40000, scoped, tag = 'scratch operand']
  %s0 = inlined_call_operand.hbm [shape: bf16[512,128], index: 0, kind: input, shape index: {}]
  %s1 = inlined_call_operand.hbm [shape: bf16[128,128], index: 1, kind: input, shape index: {}]
  %s2 = inlined_call_operand.vmem [shape: f32[1,128], index: 2, kind: input, shape index: {}]
  %s3 = inlined_call_operand.hbm [shape: bf16[128,128], index: 3, kind: input, shape index: {}]
  %s4 = inlined_call_operand.vmem [shape: f32[1,128], index: 4, kind: input, shape index: {}]
  %s5 = inlined_call_operand.hbm [shape: bf16[512,128], index: 5, kind: output, shape index: {}]
  %s6 = sld [smem:[#allocation0]]
  $region50: #{tpu_custom_call.1} parent=0
    _
  %s8 = ssub.s32 1, %s6
  %s9 = scalar_select 0, %s8, %s6
  $region1: #{tpu_custom_call.1} parent=0
    #allocation3 [shape = 'u8[131072]{0}', space=vmem, size = 0x20000, scoped, tag = 'input window, operand 0, single buffered']
    #allocation4 [shape = 's32[1]{0}', space=sflag, size = 0x4, scoped, tag = 'scoped memory for tpu_custom_call.1']
    #allocation5 [shape = 's32[1]{0}', space=sflag, size = 0x4, scoped, tag = 'scoped memory for tpu_custom_call.1']
    #allocation6 [shape = 'u8[32768]{0}', space=vmem, size = 0x8000, scoped, tag = 'input window, operand 1, single buffered']
    #allocation7 [shape = 's32[1]{0}', space=sflag, size = 0x4, scoped, tag = 'scoped memory for tpu_custom_call.1']
    #allocation8 [shape = 'u8[32768]{0}', space=vmem, size = 0x8000, scoped, tag = 'input window, operand 3, single buffered']
    #allocation9 [shape = 'u8[131072]{0}', space=vmem, size = 0x20000, scoped, tag = 'output window, operand 0, single buffered']
    %10 = vsyncpa [#allocation4], 0
    %11 = vsyncpa [#allocation7], 0
    %12 = vsyncpa [#allocation5], 0
    // Predicated region
    $region2: #{tpu_custom_call.1} parent=1 // pred_check
      _
    $region3: #{tpu_custom_call.1} parent=1 // pred_check_branch
      %14 = sbr.rel (0) target = $region5
    $region4: #{tpu_custom_call.1} parent=1 // pred_region
      %s16 = ssub.s32 4096, 4096
      %17 = vsyncadd [#allocation4], %s16
      %s18 = sshll.u32 [#allocation3], 4
      %s19 = int_to_ptr.vmem [resolvable:$true] %s18
      %24 = dma.hbm_to_vmem [thread:$0]  %s0, 4096, %s19, [#allocation4], 64, 64, 4
    $region5: #{tpu_custom_call.1} parent=1 // pred_fallthru
      _
    // Predicated region
    $region6: #{tpu_custom_call.1} parent=1 // pred_check
      _
    $region7: #{tpu_custom_call.1} parent=1 // pred_check_branch
      %26 = sbr.rel (0) target = $region9
    $region8: #{tpu_custom_call.1} parent=1 // pred_region
      %s28 = ssub.s32 1024, 1024
      %29 = vsyncadd [#allocation7], %s28
      %s30 = sshll.u32 [#allocation6], 4
      %s31 = int_to_ptr.vmem [resolvable:$true] %s30
      %36 = dma.hbm_to_vmem [thread:$0]  %s1, 1024, %s31, [#allocation7], 64, 64, 4
    $region9: #{tpu_custom_call.1} parent=1 // pred_fallthru
      _
    // Predicated region
    $region10: #{tpu_custom_call.1} parent=1 // pred_check
      _
    $region11: #{tpu_custom_call.1} parent=1 // pred_check_branch
      %38 = sbr.rel (0) target = $region13
    $region12: #{tpu_custom_call.1} parent=1 // pred_region
      _
    $region13: #{tpu_custom_call.1} parent=1 // pred_fallthru
      _
    // Predicated region
    $region14: #{tpu_custom_call.1} parent=1 // pred_check
      _
    $region15: #{tpu_custom_call.1} parent=1 // pred_check_branch
      %40 = sbr.rel (0) target = $region17
    $region16: #{tpu_custom_call.1} parent=1 // pred_region
      %s42 = ssub.s32 1024, 1024
      %43 = vsyncadd [#allocation7], %s42
      %s44 = sshll.u32 [#allocation8], 4
      %s45 = int_to_ptr.vmem [resolvable:$true] %s44
      %50 = dma.hbm_to_vmem [thread:$0]  %s3, 1024, %s45, [#allocation7], 64, 64, 4
    $region17: #{tpu_custom_call.1} parent=1 // pred_fallthru
      _
    // Predicated region
    $region18: #{tpu_custom_call.1} parent=1 // pred_check
      _
    $region19: #{tpu_custom_call.1} parent=1 // pred_check_branch
      %52 = sbr.rel (0) target = $region21
    $region20: #{tpu_custom_call.1} parent=1 // pred_region
      _
    $region21: #{tpu_custom_call.1} parent=1 // pred_fallthru
      _
    // Predicated region
    $region22: #{tpu_custom_call.1} parent=1 // pred_check
      _
    $region23: #{tpu_custom_call.1} parent=1 // pred_check_branch
      %54 = sbr.rel (0) target = $region25
    $region24: #{tpu_custom_call.1} parent=1 // pred_region
      %55 = dma.done [#allocation4], 4096
    $region25: #{tpu_custom_call.1} parent=1 // pred_fallthru
      _
    // Predicated region
    $region26: #{tpu_custom_call.1} parent=1 // pred_check
      _
    $region27: #{tpu_custom_call.1} parent=1 // pred_check_branch
      %57 = sbr.rel (0) target = $region29
    $region28: #{tpu_custom_call.1} parent=1 // pred_region
      %58 = dma.done [#allocation7], 1024
    $region29: #{tpu_custom_call.1} parent=1 // pred_fallthru
      _
    // Predicated region
    $region30: #{tpu_custom_call.1} parent=1 // pred_check
      _
    $region31: #{tpu_custom_call.1} parent=1 // pred_check_branch
      %60 = sbr.rel (0) target = $region33
    $region32: #{tpu_custom_call.1} parent=1 // pred_region
      %61 = dma.done [#allocation7], 1024
    $region33: #{tpu_custom_call.1} parent=1 // pred_fallthru
      _
    %p63 = scmp.eq.s32.totalorder 0, 0
    // Predicated region
    $region34: #{tpu_custom_call.1} parent=1 // pred_check
      %p64 = pneg %p63
    $region35: #{tpu_custom_call.1} parent=1 // pred_check_branch
      %66 = sbr.rel (%p64) target = $region37
    $region36: #{tpu_custom_call.1} parent=1 // pred_region
      %67 = vst [vmem:[#allocation2] sm:$0xff] 0.0
      %68 = vst [vmem:[#allocation2 + $0x8] sm:$0xff] 0.0
      %69 = vst [vmem:[#allocation2 + $0x10] sm:$0xff] 0.0
      %70 = vst [vmem:[#allocation2 + $0x18] sm:$0xff] 0.0
      %71 = vst [vmem:[#allocation2 + $0x20] sm:$0xff] 0.0
      %72 = vst [vmem:[#allocation2 + $0x28] sm:$0xff] 0.0
      %73 = vst [vmem:[#allocation2 + $0x30] sm:$0xff] 0.0
      %74 = vst [vmem:[#allocation2 + $0x38] sm:$0xff] 0.0
      %75 = vst [vmem:[#allocation2 + $0x40] sm:$0xff] 0.0
      %76 = vst [vmem:[#allocation2 + $0x48] sm:$0xff] 0.0
      %77 = vst [vmem:[#allocation2 + $0x50] sm:$0xff] 0.0
      %78 = vst [vmem:[#allocation2 + $0x58] sm:$0xff] 0.0
      %79 = vst [vmem:[#allocation2 + $0x60] sm:$0xff] 0.0
      %80 = vst [vmem:[#allocation2 + $0x68] sm:$0xff] 0.0
      %81 = vst [vmem:[#allocation2 + $0x70] sm:$0xff] 0.0
      %82 = vst [vmem:[#allocation2 + $0x78] sm:$0xff] 0.0
      %83 = vst [vmem:[#allocation2 + $0x80] sm:$0xff] 0.0
      %84 = vst [vmem:[#allocation2 + $0x88] sm:$0xff] 0.0
      %85 = vst [vmem:[#allocation2 + $0x90] sm:$0xff] 0.0
      %86 = vst [vmem:[#allocation2 + $0x98] sm:$0xff] 0.0
      %87 = vst [vmem:[#allocation2 + $0xa0] sm:$0xff] 0.0
      %88 = vst [vmem:[#allocation2 + $0xa8] sm:$0xff] 0.0
      %89 = vst [vmem:[#allocation2 + $0xb0] sm:$0xff] 0.0
      %90 = vst [vmem:[#allocation2 + $0xb8] sm:$0xff] 0.0
      %91 = vst [vmem:[#allocation2 + $0xc0] sm:$0xff] 0.0
      %92 = vst [vmem:[#allocation2 + $0xc8] sm:$0xff] 0.0
      %93 = vst [vmem:[#allocation2 + $0xd0] sm:$0xff] 0.0
      %94 = vst [vmem:[#allocation2 + $0xd8] sm:$0xff] 0.0
      %95 = vst [vmem:[#allocation2 + $0xe0] sm:$0xff] 0.0
      %96 = vst [vmem:[#allocation2 + $0xe8] sm:$0xff] 0.0
      %97 = vst [vmem:[#allocation2 + $0xf0] sm:$0xff] 0.0
      %98 = vst [vmem:[#allocation2 + $0xf8] sm:$0xff] 0.0
      %99 = vst [vmem:[#allocation2 + $0x100] sm:$0xff] 0.0
      %100 = vst [vmem:[#allocation2 + $0x108] sm:$0xff] 0.0
      %101 = vst [vmem:[#allocation2 + $0x110] sm:$0xff] 0.0
      %102 = vst [vmem:[#allocation2 + $0x118] sm:$0xff] 0.0
      %103 = vst [vmem:[#allocation2 + $0x120] sm:$0xff] 0.0
      %104 = vst [vmem:[#allocation2 + $0x128] sm:$0xff] 0.0
      %105 = vst [vmem:[#allocation2 + $0x130] sm:$0xff] 0.0
      %106 = vst [vmem:[#allocation2 + $0x138] sm:$0xff] 0.0
      %107 = vst [vmem:[#allocation2 + $0x140] sm:$0xff] 0.0
      %108 = vst [vmem:[#allocation2 + $0x148] sm:$0xff] 0.0
      %109 = vst [vmem:[#allocation2 + $0x150] sm:$0xff] 0.0
      %110 = vst [vmem:[#allocation2 + $0x158] sm:$0xff] 0.0
      %111 = vst [vmem:[#allocation2 + $0x160] sm:$0xff] 0.0
      %112 = vst [vmem:[#allocation2 + $0x168] sm:$0xff] 0.0
      %113 = vst [vmem:[#allocation2 + $0x170] sm:$0xff] 0.0
      %114 = vst [vmem:[#allocation2 + $0x178] sm:$0xff] 0.0
      %115 = vst [vmem:[#allocation2 + $0x180] sm:$0xff] 0.0
      %116 = vst [vmem:[#allocation2 + $0x188] sm:$0xff] 0.0
      %117 = vst [vmem:[#allocation2 + $0x190] sm:$0xff] 0.0
      %118 = vst [vmem:[#allocation2 + $0x198] sm:$0xff] 0.0
      %119 = vst [vmem:[#allocation2 + $0x1a0] sm:$0xff] 0.0
      %120 = vst [vmem:[#allocation2 + $0x1a8] sm:$0xff] 0.0
      %121 = vst [vmem:[#allocation2 + $0x1b0] sm:$0xff] 0.0
      %122 = vst [vmem:[#allocation2 + $0x1b8] sm:$0xff] 0.0
      %123 = vst [vmem:[#allocation2 + $0x1c0] sm:$0xff] 0.0
      %124 = vst [vmem:[#allocation2 + $0x1c8] sm:$0xff] 0.0
      %125 = vst [vmem:[#allocation2 + $0x1d0] sm:$0xff] 0.0
      %126 = vst [vmem:[#allocation2 + $0x1d8] sm:$0xff] 0.0
      %127 = vst [vmem:[#allocation2 + $0x1e0] sm:$0xff] 0.0
      %128 = vst [vmem:[#allocation2 + $0x1e8] sm:$0xff] 0.0
      %129 = vst [vmem:[#allocation2 + $0x1f0] sm:$0xff] 0.0
      %130 = vst [vmem:[#allocation2 + $0x1f8] sm:$0xff] 0.0
    $region37: #{tpu_custom_call.1} parent=1 // pred_fallthru
      _
    %v131 = vld [vmem:[#allocation2] sm:$0xff]
    %v132 = vld [vmem:[#allocation2 + $0x8] sm:$0xff]
    %v133 = vld [vmem:[#allocation2 + $0x10] sm:$0xff]
    %v134 = vld [vmem:[#allocation2 + $0x18] sm:$0xff]
    %v135 = vld [vmem:[#allocation2 + $0x20] sm:$0xff]
    %v136 = vld [vmem:[#allocation2 + $0x28] sm:$0xff]
    %v137 = vld [vmem:[#allocation2 + $0x30] sm:$0xff]
    %v138 = vld [vmem:[#allocation2 + $0x38] sm:$0xff]
    %v139 = vld [vmem:[#allocation2 + $0x40] sm:$0xff]
    %v140 = vld [vmem:[#allocation2 + $0x48] sm:$0xff]
    %v141 = vld [vmem:[#allocation2 + $0x50] sm:$0xff]
    %v142 = vld [vmem:[#allocation2 + $0x58] sm:$0xff]
    %v143 = vld [vmem:[#allocation2 + $0x60] sm:$0xff]
    %v144 = vld [vmem:[#allocation2 + $0x68] sm:$0xff]
    %v145 = vld [vmem:[#allocation2 + $0x70] sm:$0xff]
    %v146 = vld [vmem:[#allocation2 + $0x78] sm:$0xff]
    %v147 = vld [vmem:[#allocation2 + $0x80] sm:$0xff]
    %v148 = vld [vmem:[#allocation2 + $0x88] sm:$0xff]
    %v149 = vld [vmem:[#allocation2 + $0x90] sm:$0xff]
    %v150 = vld [vmem:[#allocation2 + $0x98] sm:$0xff]
    %v151 = vld [vmem:[#allocation2 + $0xa0] sm:$0xff]
    %v152 = vld [vmem:[#allocation2 + $0xa8] sm:$0xff]
    %v153 = vld [vmem:[#allocation2 + $0xb0] sm:$0xff]
    %v154 = vld [vmem:[#allocation2 + $0xb8] sm:$0xff]
    %v155 = vld [vmem:[#allocation2 + $0xc0] sm:$0xff]
    %v156 = vld [vmem:[#allocation2 + $0xc8] sm:$0xff]
    %v157 = vld [vmem:[#allocation2 + $0xd0] sm:$0xff]
    %v158 = vld [vmem:[#allocation2 + $0xd8] sm:$0xff]
    %v159 = vld [vmem:[#allocation2 + $0xe0] sm:$0xff]
    %v160 = vld [vmem:[#allocation2 + $0xe8] sm:$0xff]
    %v161 = vld [vmem:[#allocation2 + $0xf0] sm:$0xff]
    %v162 = vld [vmem:[#allocation2 + $0xf8] sm:$0xff]
    %v163 = vld [vmem:[#allocation2 + $0x100] sm:$0xff]
    %v164 = vld [vmem:[#allocation2 + $0x108] sm:$0xff]
    %v165 = vld [vmem:[#allocation2 + $0x110] sm:$0xff]
    %v166 = vld [vmem:[#allocation2 + $0x118] sm:$0xff]
    %v167 = vld [vmem:[#allocation2 + $0x120] sm:$0xff]
    %v168 = vld [vmem:[#allocation2 + $0x128] sm:$0xff]
    %v169 = vld [vmem:[#allocation2 + $0x130] sm:$0xff]
    %v170 = vld [vmem:[#allocation2 + $0x138] sm:$0xff]
    %v171 = vld [vmem:[#allocation2 + $0x140] sm:$0xff]
    %v172 = vld [vmem:[#allocation2 + $0x148] sm:$0xff]
    %v173 = vld [vmem:[#allocation2 + $0x150] sm:$0xff]
    %v174 = vld [vmem:[#allocation2 + $0x158] sm:$0xff]
    %v175 = vld [vmem:[#allocation2 + $0x160] sm:$0xff]
    %v176 = vld [vmem:[#allocation2 + $0x168] sm:$0xff]
    %v177 = vld [vmem:[#allocation2 + $0x170] sm:$0xff]
    %v178 = vld [vmem:[#allocation2 + $0x178] sm:$0xff]
    %v179 = vld [vmem:[#allocation2 + $0x180] sm:$0xff]
    %v180 = vld [vmem:[#allocation2 + $0x188] sm:$0xff]
    %v181 = vld [vmem:[#allocation2 + $0x190] sm:$0xff]
    %v182 = vld [vmem:[#allocation2 + $0x198] sm:$0xff]
    %v183 = vld [vmem:[#allocation2 + $0x1a0] sm:$0xff]
    %v184 = vld [vmem:[#allocation2 + $0x1a8] sm:$0xff]
    %v185 = vld [vmem:[#allocation2 + $0x1b0] sm:$0xff]
    %v186 = vld [vmem:[#allocation2 + $0x1b8] sm:$0xff]
    %v187 = vld [vmem:[#allocation2 + $0x1c0] sm:$0xff]
    %v188 = vld [vmem:[#allocation2 + $0x1c8] sm:$0xff]
    %v189 = vld [vmem:[#allocation2 + $0x1d0] sm:$0xff]
    %v190 = vld [vmem:[#allocation2 + $0x1d8] sm:$0xff]
    %v191 = vld [vmem:[#allocation2 + $0x1e0] sm:$0xff]
    %v192 = vld [vmem:[#allocation2 + $0x1e8] sm:$0xff]
    %v193 = vld [vmem:[#allocation2 + $0x1f0] sm:$0xff]
    %v194 = vld [vmem:[#allocation2 + $0x1f8] sm:$0xff]
    %v195 = vld [vmem:[#allocation3] sm:$0xf]
    %v196 = vld [vmem:[#allocation3 + $0x4] sm:$0xf]
    %v197 = vld [vmem:[#allocation3 + $0x8] sm:$0xf]
    %v198 = vld [vmem:[#allocation3 + $0xc] sm:$0xf]
    %v199 = vld [vmem:[#allocation3 + $0x10] sm:$0xf]
    %v200 = vld [vmem:[#allocation3 + $0x14] sm:$0xf]
    %v201 = vld [vmem:[#allocation3 + $0x18] sm:$0xf]
    %v202 = vld [vmem:[#allocation3 + $0x1c] sm:$0xf]
    %v203 = vld [vmem:[#allocation3 + $0x20] sm:$0xf]
    %v204 = vld [vmem:[#allocation3 + $0x24] sm:$0xf]
    %v205 = vld [vmem:[#allocation3 + $0x28] sm:$0xf]
    %v206 = vld [vmem:[#allocation3 + $0x2c] sm:$0xf]
    %v207 = vld [vmem:[#allocation3 + $0x30] sm:$0xf]
    %v208 = vld [vmem:[#allocation3 + $0x34] sm:$0xf]
    %v209 = vld [vmem:[#allocation3 + $0x38] sm:$0xf]
    %v210 = vld [vmem:[#allocation3 + $0x3c] sm:$0xf]
    %v211 = vld [vmem:[#allocation3 + $0x40] sm:$0xf]
    %v212 = vld [vmem:[#allocation3 + $0x44] sm:$0xf]
    %v213 = vld [vmem:[#allocation3 + $0x48] sm:$0xf]
    %v214 = vld [vmem:[#allocation3 + $0x4c] sm:$0xf]
    %v215 = vld [vmem:[#allocation3 + $0x50] sm:$0xf]
    %v216 = vld [vmem:[#allocation3 + $0x54] sm:$0xf]
    %v217 = vld [vmem:[#allocation3 + $0x58] sm:$0xf]
    %v218 = vld [vmem:[#allocation3 + $0x5c] sm:$0xf]
    %v219 = vld [vmem:[#allocation3 + $0x60] sm:$0xf]
    %v220 = vld [vmem:[#allocation3 + $0x64] sm:$0xf]
    %v221 = vld [vmem:[#allocation3 + $0x68] sm:$0xf]
    %v222 = vld [vmem:[#allocation3 + $0x6c] sm:$0xf]
    %v223 = vld [vmem:[#allocation3 + $0x70] sm:$0xf]
    %v224 = vld [vmem:[#allocation3 + $0x74] sm:$0xf]
    %v225 = vld [vmem:[#allocation3 + $0x78] sm:$0xf]
    %v226 = vld [vmem:[#allocation3 + $0x7c] sm:$0xf]
    %v227 = vld [vmem:[#allocation3 + $0x80] sm:$0xf]
    %v228 = vld [vmem:[#allocation3 + $0x84] sm:$0xf]
    %v229 = vld [vmem:[#allocation3 + $0x88] sm:$0xf]
    %v230 = vld [vmem:[#allocation3 + $0x8c] sm:$0xf]
    %v231 = vld [vmem:[#allocation3 + $0x90] sm:$0xf]
    %v232 = vld [vmem:[#allocation3 + $0x94] sm:$0xf]
    %v233 = vld [vmem:[#allocation3 + $0x98] sm:$0xf]
    %v234 = vld [vmem:[#allocation3 + $0x9c] sm:$0xf]
    %v235 = vld [vmem:[#allocation3 + $0xa0] sm:$0xf]
    %v236 = vld [vmem:[#allocation3 + $0xa4] sm:$0xf]
    %v237 = vld [vmem:[#allocation3 + $0xa8] sm:$0xf]
    %v238 = vld [vmem:[#allocation3 + $0xac] sm:$0xf]
    %v239 = vld [vmem:[#allocation3 + $0xb0] sm:$0xf]
    %v240 = vld [vmem:[#allocation3 + $0xb4] sm:$0xf]
    %v241 = vld [vmem:[#allocation3 + $0xb8] sm:$0xf]
    %v242 = vld [vmem:[#allocation3 + $0xbc] sm:$0xf]
    %v243 = vld [vmem:[#allocation3 + $0xc0] sm:$0xf]
    %v244 = vld [vmem:[#allocation3 + $0xc4] sm:$0xf]
    %v245 = vld [vmem:[#allocation3 + $0xc8] sm:$0xf]
    %v246 = vld [vmem:[#allocation3 + $0xcc] sm:$0xf]
    %v247 = vld [vmem:[#allocation3 + $0xd0] sm:$0xf]
    %v248 = vld [vmem:[#allocation3 + $0xd4] sm:$0xf]
    %v249 = vld [vmem:[#allocation3 + $0xd8] sm:$0xf]
    %v250 = vld [vmem:[#allocation3 + $0xdc] sm:$0xf]
    %v251 = vld [vmem:[#allocation3 + $0xe0] sm:$0xf]
    %v252 = vld [vmem:[#allocation3 + $0xe4] sm:$0xf]
    %v253 = vld [vmem:[#allocation3 + $0xe8] sm:$0xf]
    %v254 = vld [vmem:[#allocation3 + $0xec] sm:$0xf]
    %v255 = vld [vmem:[#allocation3 + $0xf0] sm:$0xf]
    %v256 = vld [vmem:[#allocation3 + $0xf4] sm:$0xf]
    %v257 = vld [vmem:[#allocation3 + $0xf8] sm:$0xf]
    %v258 = vld [vmem:[#allocation3 + $0xfc] sm:$0xf]
    %v259 = vld [vmem:[#allocation6] sm:$0xf]
    %v260 = vld [vmem:[#allocation6 + $0x4] sm:$0xf]
    %v261 = vld [vmem:[#allocation6 + $0x8] sm:$0xf]
    %v262 = vld [vmem:[#allocation6 + $0xc] sm:$0xf]
    %v263 = vld [vmem:[#allocation6 + $0x10] sm:$0xf]
    %v264 = vld [vmem:[#allocation6 + $0x14] sm:$0xf]
    %v265 = vld [vmem:[#allocation6 + $0x18] sm:$0xf]
    %v266 = vld [vmem:[#allocation6 + $0x1c] sm:$0xf]
    %v267 = vld [vmem:[#allocation6 + $0x20] sm:$0xf]
    %v268 = vld [vmem:[#allocation6 + $0x24] sm:$0xf]
    %v269 = vld [vmem:[#allocation6 + $0x28] sm:$0xf]
    %v270 = vld [vmem:[#allocation6 + $0x2c] sm:$0xf]
    %v271 = vld [vmem:[#allocation6 + $0x30] sm:$0xf]
    %v272 = vld [vmem:[#allocation6 + $0x34] sm:$0xf]
    %v273 = vld [vmem:[#allocation6 + $0x38] sm:$0xf]
    %v274 = vld [vmem:[#allocation6 + $0x3c] sm:$0xf]
    %v339 = vunpack.c.l.b16 %v195
    %v340 = vunpack.c.l.b16 %v196
    %v341 = vunpack.c.l.b16 %v197
    %v342 = vunpack.c.l.b16 %v198
    %v343 = vunpack.c.l.b16 %v199
    %v344 = vunpack.c.l.b16 %v200
    %v345 = vunpack.c.l.b16 %v201
    %v346 = vunpack.c.l.b16 %v202
    %v347 = vunpack.c.l.b16 %v203
    %v348 = vunpack.c.l.b16 %v204
    %v349 = vunpack.c.l.b16 %v205
    %v350 = vunpack.c.l.b16 %v206
    %v351 = vunpack.c.l.b16 %v207
    %v352 = vunpack.c.l.b16 %v208
    %v353 = vunpack.c.l.b16 %v209
    %v354 = vunpack.c.l.b16 %v210
    %v355 = vunpack.c.l.b16 %v211
    %v356 = vunpack.c.l.b16 %v212
    %v357 = vunpack.c.l.b16 %v213
    %v358 = vunpack.c.l.b16 %v214
    %v359 = vunpack.c.l.b16 %v215
    %v360 = vunpack.c.l.b16 %v216
    %v361 = vunpack.c.l.b16 %v217
    %v362 = vunpack.c.l.b16 %v218
    %v363 = vunpack.c.l.b16 %v219
    %v364 = vunpack.c.l.b16 %v220
    %v365 = vunpack.c.l.b16 %v221
    %v366 = vunpack.c.l.b16 %v222
    %v367 = vunpack.c.l.b16 %v223
    %v368 = vunpack.c.l.b16 %v224
    %v369 = vunpack.c.l.b16 %v225
    %v370 = vunpack.c.l.b16 %v226
    %v371 = vunpack.c.l.b16 %v227
    %v372 = vunpack.c.l.b16 %v228
    %v373 = vunpack.c.l.b16 %v229
    %v374 = vunpack.c.l.b16 %v230
    %v375 = vunpack.c.l.b16 %v231
    %v376 = vunpack.c.l.b16 %v232
    %v377 = vunpack.c.l.b16 %v233
    %v378 = vunpack.c.l.b16 %v234
    %v379 = vunpack.c.l.b16 %v235
    %v380 = vunpack.c.l.b16 %v236
    %v381 = vunpack.c.l.b16 %v237
    %v382 = vunpack.c.l.b16 %v238
    %v383 = vunpack.c.l.b16 %v239
    %v384 = vunpack.c.l.b16 %v240
    %v385 = vunpack.c.l.b16 %v241
    %v386 = vunpack.c.l.b16 %v242
    %v387 = vunpack.c.l.b16 %v243
    %v388 = vunpack.c.l.b16 %v244
    %v389 = vunpack.c.l.b16 %v245
    %v390 = vunpack.c.l.b16 %v246
    %v391 = vunpack.c.l.b16 %v247
    %v392 = vunpack.c.l.b16 %v248
    %v393 = vunpack.c.l.b16 %v249
    %v394 = vunpack.c.l.b16 %v250
    %v395 = vunpack.c.l.b16 %v251
    %v396 = vunpack.c.l.b16 %v252
    %v397 = vunpack.c.l.b16 %v253
    %v398 = vunpack.c.l.b16 %v254
    %v399 = vunpack.c.l.b16 %v255
    %v400 = vunpack.c.l.b16 %v256
    %v401 = vunpack.c.l.b16 %v257
    %v402 = vunpack.c.l.b16 %v258
    %v403 = vpack.c.b16 %v340, %v339
    %v404 = vpack.c.b16 %v342, %v341
    %v405 = vpack.c.b16 %v344, %v343
    %v406 = vpack.c.b16 %v346, %v345
    %v407 = vpack.c.b16 %v348, %v347
    %v408 = vpack.c.b16 %v350, %v349
    %v409 = vpack.c.b16 %v352, %v351
    %v410 = vpack.c.b16 %v354, %v353
    %v411 = vpack.c.b16 %v356, %v355
    %v412 = vpack.c.b16 %v358, %v357
    %v413 = vpack.c.b16 %v360, %v359
    %v414 = vpack.c.b16 %v362, %v361
    %v415 = vpack.c.b16 %v364, %v363
    %v416 = vpack.c.b16 %v366, %v365
    %v417 = vpack.c.b16 %v368, %v367
    %v418 = vpack.c.b16 %v370, %v369
    %v419 = vpack.c.b16 %v372, %v371
    %v420 = vpack.c.b16 %v374, %v373
    %v421 = vpack.c.b16 %v376, %v375
    %v422 = vpack.c.b16 %v378, %v377
    %v423 = vpack.c.b16 %v380, %v379
    %v424 = vpack.c.b16 %v382, %v381
    %v425 = vpack.c.b16 %v384, %v383
    %v426 = vpack.c.b16 %v386, %v385
    %v427 = vpack.c.b16 %v388, %v387
    %v428 = vpack.c.b16 %v390, %v389
    %v429 = vpack.c.b16 %v392, %v391
    %v430 = vpack.c.b16 %v394, %v393
    %v431 = vpack.c.b16 %v396, %v395
    %v432 = vpack.c.b16 %v398, %v397
    %v433 = vpack.c.b16 %v400, %v399
    %v434 = vpack.c.b16 %v402, %v401
    %v483 = vunpack.c.l.b16 %v259
    %v484 = vunpack.c.l.b16 %v260
    %v485 = vunpack.c.l.b16 %v261
    %v486 = vunpack.c.l.b16 %v262
    %v487 = vunpack.c.l.b16 %v263
    %v488 = vunpack.c.l.b16 %v264
    %v489 = vunpack.c.l.b16 %v265
    %v490 = vunpack.c.l.b16 %v266
    %v491 = vunpack.c.l.b16 %v267
    %v492 = vunpack.c.l.b16 %v268
    %v493 = vunpack.c.l.b16 %v269
    %v494 = vunpack.c.l.b16 %v270
    %v495 = vunpack.c.l.b16 %v271
    %v496 = vunpack.c.l.b16 %v272
    %v497 = vunpack.c.l.b16 %v273
    %v498 = vunpack.c.l.b16 %v274
    %v499 = vpack.c.b16 %v484, %v483
    %v500 = vpack.c.b16 %v486, %v485
    %v501 = vpack.c.b16 %v488, %v487
    %v502 = vpack.c.b16 %v490, %v489
    %v503 = vpack.c.b16 %v492, %v491
    %v504 = vpack.c.b16 %v494, %v493
    %v505 = vpack.c.b16 %v496, %v495
    %v506 = vpack.c.b16 %v498, %v497
    %515 = vmatprep.subr.bf16.mxu0 0
    %516 = vmatpush1.bf16.msra.mxu0 %v499
    %517 = vmatprep.subr.bf16.mxu0 0
    %518 = vmatpush1.bf16.msra.mxu0 %v500
    %519 = vmatprep.subr.bf16.mxu0 0
    %520 = vmatpush1.bf16.msra.mxu0 %v501
    %521 = vmatprep.subr.bf16.mxu0 0
    %522 = vmatpush1.bf16.msra.mxu0 %v502
    %523 = vmatprep.subr.bf16.mxu0 0
    %524 = vmatpush1.bf16.msra.mxu0 %v503
    %525 = vmatprep.subr.bf16.mxu0 0
    %526 = vmatpush1.bf16.msra.mxu0 %v504
    %527 = vmatprep.subr.bf16.mxu0 0
    %528 = vmatpush1.bf16.msra.mxu0 %v505
    %529 = vmatprep.subr.bf16.mxu0 0
    %530 = vmatpush1.bf16.msra.mxu0 %v506
    %531 = vmatprep.subr.bf16.mxu0 0
    %532 = vmatpush1.bf16.msra.mxu0 0
    %533 = vmatprep.subr.bf16.mxu0 0
    %534 = vmatpush1.bf16.msra.mxu0 0
    %535 = vmatprep.subr.bf16.mxu0 0
    %536 = vmatpush1.bf16.msra.mxu0 0
    %537 = vmatprep.subr.bf16.mxu0 0
    %538 = vmatpush1.bf16.msra.mxu0 0
    %539 = vmatprep.subr.bf16.mxu0 0
    %540 = vmatpush1.bf16.msra.mxu0 0
    %541 = vmatprep.subr.bf16.mxu0 0
    %542 = vmatpush1.bf16.msra.mxu0 0
    %543 = vmatprep.subr.bf16.mxu0 0
    %544 = vmatpush1.bf16.msra.mxu0 0
    %545 = vmatprep.subr.bf16.mxu0 0
    %546 = vmatpush1.bf16.msra.mxu0 0
    %547 = vmatprep.mubr.bf16.mxu0 0
    %548 = vmatmul.mubr.bf16.gmra.mrb[0].mxu0 %v403
    %v549 = vpop.f32.mrb[0].mxu0
    %v550 = vadd.f32 0.0, %v549
    %v551 = vpop.f32.mrb[0].mxu0
    %v552 = vpop.f32.mrb[0].mxu0
    %v553 = vadd.f32 0.0, %v552
    %v554 = vpop.f32.mrb[0].mxu0
    %555 = vmatprep.mubr.bf16.mxu0 0
    %556 = vmatmul.mubr.bf16.gmra.mrb[0].mxu0 %v404
    %v557 = vpop.f32.mrb[0].mxu0
    %v558 = vadd.f32 0.0, %v557
    %v559 = vpop.f32.mrb[0].mxu0
    %v560 = vpop.f32.mrb[0].mxu0
    %v561 = vadd.f32 0.0, %v560
    %v562 = vpop.f32.mrb[0].mxu0
    %563 = vmatprep.mubr.bf16.mxu0 0
    %564 = vmatmul.mubr.bf16.gmra.mrb[0].mxu0 %v405
    %v565 = vpop.f32.mrb[0].mxu0
    %v566 = vadd.f32 0.0, %v565
    %v567 = vpop.f32.mrb[0].mxu0
    %v568 = vpop.f32.mrb[0].mxu0
    %v569 = vadd.f32 0.0, %v568
    %v570 = vpop.f32.mrb[0].mxu0
    %571 = vmatprep.mubr.bf16.mxu0 0
    %572 = vmatmul.mubr.bf16.gmra.mrb[0].mxu0 %v406
    %v573 = vpop.f32.mrb[0].mxu0
    %v574 = vadd.f32 0.0, %v573
    %v575 = vpop.f32.mrb[0].mxu0
    %v576 = vpop.f32.mrb[0].mxu0
    %v577 = vadd.f32 0.0, %v576
    %v578 = vpop.f32.mrb[0].mxu0
    %579 = vmatprep.mubr.bf16.mxu0 0
    %580 = vmatmul.mubr.bf16.gmra.mrb[0].mxu0 %v407
    %v581 = vpop.f32.mrb[0].mxu0
    %v582 = vadd.f32 0.0, %v581
    %v583 = vpop.f32.mrb[0].mxu0
    %v584 = vpop.f32.mrb[0].mxu0
    %v585 = vadd.f32 0.0, %v584
    %v586 = vpop.f32.mrb[0].mxu0
    %587 = vmatprep.mubr.bf16.mxu0 0
    %588 = vmatmul.mubr.bf16.gmra.mrb[0].mxu0 %v408
    %v589 = vpop.f32.mrb[0].mxu0
    %v590 = vadd.f32 0.0, %v589
    %v591 = vpop.f32.mrb[0].mxu0
    %v592 = vpop.f32.mrb[0].mxu0
    %v593 = vadd.f32 0.0, %v592
    %v594 = vpop.f32.mrb[0].mxu0
    %595 = vmatprep.mubr.bf16.mxu0 0
    %596 = vmatmul.mubr.bf16.gmra.mrb[0].mxu0 %v409
    %v597 = vpop.f32.mrb[0].mxu0
    %v598 = vadd.f32 0.0, %v597
    %v599 = vpop.f32.mrb[0].mxu0
    %v600 = vpop.f32.mrb[0].mxu0
    %v601 = vadd.f32 0.0, %v600
    %v602 = vpop.f32.mrb[0].mxu0
    %603 = vmatprep.mubr.bf16.mxu0 0
    %604 = vmatmul.mubr.bf16.gmra.mrb[0].mxu0 %v410
    %v605 = vpop.f32.mrb[0].mxu0
    %v606 = vadd.f32 0.0, %v605
    %v607 = vpop.f32.mrb[0].mxu0
    %v608 = vpop.f32.mrb[0].mxu0
    %v609 = vadd.f32 0.0, %v608
    %v610 = vpop.f32.mrb[0].mxu0
    %611 = vmatprep.mubr.bf16.mxu0 0
    %612 = vmatmul.mubr.bf16.gmra.mrb[0].mxu0 %v411
    %v613 = vpop.f32.mrb[0].mxu0
    %v614 = vadd.f32 0.0, %v613
    %v615 = vpop.f32.mrb[0].mxu0
    %v616 = vpop.f32.mrb[0].mxu0
    %v617 = vadd.f32 0.0, %v616
    %v618 = vpop.f32.mrb[0].mxu0
    %619 = vmatprep.mubr.bf16.mxu0 0
    %620 = vmatmul.mubr.bf16.gmra.mrb[0].mxu0 %v412
    %v621 = vpop.f32.mrb[0].mxu0
    %v622 = vadd.f32 0.0, %v621
    %v623 = vpop.f32.mrb[0].mxu0
    %v624 = vpop.f32.mrb[0].mxu0
    %v625 = vadd.f32 0.0, %v624
    %v626 = vpop.f32.mrb[0].mxu0
    %627 = vmatprep.mubr.bf16.mxu0 0
    %628 = vmatmul.mubr.bf16.gmra.mrb[0].mxu0 %v413
    %v629 = vpop.f32.mrb[0].mxu0
    %v630 = vadd.f32 0.0, %v629
    %v631 = vpop.f32.mrb[0].mxu0
    %v632 = vpop.f32.mrb[0].mxu0
    %v633 = vadd.f32 0.0, %v632
    %v634 = vpop.f32.mrb[0].mxu0
    %635 = vmatprep.mubr.bf16.mxu0 0
    %636 = vmatmul.mubr.bf16.gmra.mrb[0].mxu0 %v414
    %v637 = vpop.f32.mrb[0].mxu0
    %v638 = vadd.f32 0.0, %v637
    %v639 = vpop.f32.mrb[0].mxu0
    %v640 = vpop.f32.mrb[0].mxu0
    %v641 = vadd.f32 0.0, %v640
    %v642 = vpop.f32.mrb[0].mxu0
    %643 = vmatprep.mubr.bf16.mxu0 0
    %644 = vmatmul.mubr.bf16.gmra.mrb[0].mxu0 %v415
    %v645 = vpop.f32.mrb[0].mxu0
    %v646 = vadd.f32 0.0, %v645
    %v647 = vpop.f32.mrb[0].mxu0
    %v648 = vpop.f32.mrb[0].mxu0
    %v649 = vadd.f32 0.0, %v648
    %v650 = vpop.f32.mrb[0].mxu0
    %651 = vmatprep.mubr.bf16.mxu0 0
    %652 = vmatmul.mubr.bf16.gmra.mrb[0].mxu0 %v416
    %v653 = vpop.f32.mrb[0].mxu0
    %v654 = vadd.f32 0.0, %v653
    %v655 = vpop.f32.mrb[0].mxu0
    %v656 = vpop.f32.mrb[0].mxu0
    %v657 = vadd.f32 0.0, %v656
    %v658 = vpop.f32.mrb[0].mxu0
    %659 = vmatprep.mubr.bf16.mxu0 0
    %660 = vmatmul.mubr.bf16.gmra.mrb[0].mxu0 %v417
    %v661 = vpop.f32.mrb[0].mxu0
    %v662 = vadd.f32 0.0, %v661
    %v663 = vpop.f32.mrb[0].mxu0
    %v664 = vpop.f32.mrb[0].mxu0
    %v665 = vadd.f32 0.0, %v664
    %v666 = vpop.f32.mrb[0].mxu0
    %667 = vmatprep.mubr.bf16.mxu0 0
    %668 = vmatmul.mubr.bf16.gmra.mrb[0].mxu0 %v418
    %v669 = vpop.f32.mrb[0].mxu0
    %v670 = vadd.f32 0.0, %v669
    %v671 = vpop.f32.mrb[0].mxu0
    %v672 = vpop.f32.mrb[0].mxu0
    %v673 = vadd.f32 0.0, %v672
    %v674 = vpop.f32.mrb[0].mxu0
    %675 = vmatprep.mubr.bf16.mxu0 0
    %676 = vmatmul.mubr.bf16.gmra.mrb[0].mxu0 %v419
    %v677 = vpop.f32.mrb[0].mxu0
    %v678 = vadd.f32 0.0, %v677
    %v679 = vpop.f32.mrb[0].mxu0
    %v680 = vpop.f32.mrb[0].mxu0
    %v681 = vadd.f32 0.0, %v680
    %v682 = vpop.f32.mrb[0].mxu0
    %683 = vmatprep.mubr.bf16.mxu0 0
    %684 = vmatmul.mubr.bf16.gmra.mrb[0].mxu0 %v420
    %v685 = vpop.f32.mrb[0].mxu0
    %v686 = vadd.f32 0.0, %v685
    %v687 = vpop.f32.mrb[0].mxu0
    %v688 = vpop.f32.mrb[0].mxu0
    %v689 = vadd.f32 0.0, %v688
    %v690 = vpop.f32.mrb[0].mxu0
    %691 = vmatprep.mubr.bf16.mxu0 0
    %692 = vmatmul.mubr.bf16.gmra.mrb[0].mxu0 %v421
    %v693 = vpop.f32.mrb[0].mxu0
    %v694 = vadd.f32 0.0, %v693
    %v695 = vpop.f32.mrb[0].mxu0
    %v696 = vpop.f32.mrb[0].mxu0
    %v697 = vadd.f32 0.0, %v696
    %v698 = vpop.f32.mrb[0].mxu0
    %699 = vmatprep.mubr.bf16.mxu0 0
    %700 = vmatmul.mubr.bf16.gmra.mrb[0].mxu0 %v422
    %v701 = vpop.f32.mrb[0].mxu0
    %v702 = vadd.f32 0.0, %v701
    %v703 = vpop.f32.mrb[0].mxu0
    %v704 = vpop.f32.mrb[0].mxu0
    %v705 = vadd.f32 0.0, %v704
    %v706 = vpop.f32.mrb[0].mxu0
    %707 = vmatprep.mubr.bf16.mxu0 0
    %708 = vmatmul.mubr.bf16.gmra.mrb[0].mxu0 %v423
    %v709 = vpop.f32.mrb[0].mxu0
    %v710 = vadd.f32 0.0, %v709
    %v711 = vpop.f32.mrb[0].mxu0
    %v712 = vpop.f32.mrb[0].mxu0
    %v713 = vadd.f32 0.0, %v712
    %v714 = vpop.f32.mrb[0].mxu0
    %715 = vmatprep.mubr.bf16.mxu0 0
    %716 = vmatmul.mubr.bf16.gmra.mrb[0].mxu0 %v424
    %v717 = vpop.f32.mrb[0].mxu0
    %v718 = vadd.f32 0.0, %v717
    %v719 = vpop.f32.mrb[0].mxu0
    %v720 = vpop.f32.mrb[0].mxu0
    %v721 = vadd.f32 0.0, %v720
    %v722 = vpop.f32.mrb[0].mxu0
    %723 = vmatprep.mubr.bf16.mxu0 0
    %724 = vmatmul.mubr.bf16.gmra.mrb[0].mxu0 %v425
    %v725 = vpop.f32.mrb[0].mxu0
    %v726 = vadd.f32 0.0, %v725
    %v727 = vpop.f32.mrb[0].mxu0
    %v728 = vpop.f32.mrb[0].mxu0
    %v729 = vadd.f32 0.0, %v728
    %v730 = vpop.f32.mrb[0].mxu0
    %731 = vmatprep.mubr.bf16.mxu0 0
    %732 = vmatmul.mubr.bf16.gmra.mrb[0].mxu0 %v426
    %v733 = vpop.f32.mrb[0].mxu0
    %v734 = vadd.f32 0.0, %v733
    %v735 = vpop.f32.mrb[0].mxu0
    %v736 = vpop.f32.mrb[0].mxu0
    %v737 = vadd.f32 0.0, %v736
    %v738 = vpop.f32.mrb[0].mxu0
    %739 = vmatprep.mubr.bf16.mxu0 0
    %740 = vmatmul.mubr.bf16.gmra.mrb[0].mxu0 %v427
    %v741 = vpop.f32.mrb[0].mxu0
    %v742 = vadd.f32 0.0, %v741
    %v743 = vpop.f32.mrb[0].mxu0
    %v744 = vpop.f32.mrb[0].mxu0
    %v745 = vadd.f32 0.0, %v744
    %v746 = vpop.f32.mrb[0].mxu0
    %747 = vmatprep.mubr.bf16.mxu0 0
    %748 = vmatmul.mubr.bf16.gmra.mrb[0].mxu0 %v428
    %v749 = vpop.f32.mrb[0].mxu0
    %v750 = vadd.f32 0.0, %v749
    %v751 = vpop.f32.mrb[0].mxu0
    %v752 = vpop.f32.mrb[0].mxu0
    %v753 = vadd.f32 0.0, %v752
    %v754 = vpop.f32.mrb[0].mxu0
    %755 = vmatprep.mubr.bf16.mxu0 0
    %756 = vmatmul.mubr.bf16.gmra.mrb[0].mxu0 %v429
    %v757 = vpop.f32.mrb[0].mxu0
    %v758 = vadd.f32 0.0, %v757
    %v759 = vpop.f32.mrb[0].mxu0
    %v760 = vpop.f32.mrb[0].mxu0
    %v761 = vadd.f32 0.0, %v760
    %v762 = vpop.f32.mrb[0].mxu0
    %763 = vmatprep.mubr.bf16.mxu0 0
    %764 = vmatmul.mubr.bf16.gmra.mrb[0].mxu0 %v430
    %v765 = vpop.f32.mrb[0].mxu0
    %v766 = vadd.f32 0.0, %v765
    %v767 = vpop.f32.mrb[0].mxu0
    %v768 = vpop.f32.mrb[0].mxu0
    %v769 = vadd.f32 0.0, %v768
    %v770 = vpop.f32.mrb[0].mxu0
    %771 = vmatprep.mubr.bf16.mxu0 0
    %772 = vmatmul.mubr.bf16.gmra.mrb[0].mxu0 %v431
    %v773 = vpop.f32.mrb[0].mxu0
    %v774 = vadd.f32 0.0, %v773
    %v775 = vpop.f32.mrb[0].mxu0
    %v776 = vpop.f32.mrb[0].mxu0
    %v777 = vadd.f32 0.0, %v776
    %v778 = vpop.f32.mrb[0].mxu0
    %779 = vmatprep.mubr.bf16.mxu0 0
    %780 = vmatmul.mubr.bf16.gmra.mrb[0].mxu0 %v432
    %v781 = vpop.f32.mrb[0].mxu0
    %v782 = vadd.f32 0.0, %v781
    %v783 = vpop.f32.mrb[0].mxu0
    %v784 = vpop.f32.mrb[0].mxu0
    %v785 = vadd.f32 0.0, %v784
    %v786 = vpop.f32.mrb[0].mxu0
    %787 = vmatprep.mubr.bf16.mxu0 0
    %788 = vmatmul.mubr.bf16.gmra.mrb[0].mxu0 %v433
    %v789 = vpop.f32.mrb[0].mxu0
    %v790 = vadd.f32 0.0, %v789
    %v791 = vpop.f32.mrb[0].mxu0
    %v792 = vpop.f32.mrb[0].mxu0
    %v793 = vadd.f32 0.0, %v792
    %v794 = vpop.f32.mrb[0].mxu0
    %795 = vmatprep.mubr.bf16.mxu0 0
    %796 = vmatmul.mubr.bf16.gmra.mrb[0].mxu0 %v434
    %v797 = vpop.f32.mrb[0].mxu0
    %v798 = vadd.f32 0.0, %v797
    %v799 = vpop.f32.mrb[0].mxu0
    %v800 = vpop.f32.mrb[0].mxu0
    %v801 = vadd.f32 0.0, %v800
    %v802 = vpop.f32.mrb[0].mxu0
    %803 = vdwg.mxu0
    %v804 = vadd.f32 %v131, %v550
    %v805 = vadd.f32 %v132, %v553
    %v806 = vadd.f32 %v133, %v558
    %v807 = vadd.f32 %v134, %v561
    %v808 = vadd.f32 %v135, %v566
    %v809 = vadd.f32 %v136, %v569
    %v810 = vadd.f32 %v137, %v574
    %v811 = vadd.f32 %v138, %v577
    %v812 = vadd.f32 %v139, %v582
    %v813 = vadd.f32 %v140, %v585
    %v814 = vadd.f32 %v141, %v590
    %v815 = vadd.f32 %v142, %v593
    %v816 = vadd.f32 %v143, %v598
    %v817 = vadd.f32 %v144, %v601
    %v818 = vadd.f32 %v145, %v606
    %v819 = vadd.f32 %v146, %v609
    %v820 = vadd.f32 %v147, %v614
    %v821 = vadd.f32 %v148, %v617
    %v822 = vadd.f32 %v149, %v622
    %v823 = vadd.f32 %v150, %v625
    %v824 = vadd.f32 %v151, %v630
    %v825 = vadd.f32 %v152, %v633
    %v826 = vadd.f32 %v153, %v638
    %v827 = vadd.f32 %v154, %v641
    %v828 = vadd.f32 %v155, %v646
    %v829 = vadd.f32 %v156, %v649
    %v830 = vadd.f32 %v157, %v654
    %v831 = vadd.f32 %v158, %v657
    %v832 = vadd.f32 %v159, %v662
    %v833 = vadd.f32 %v160, %v665
    %v834 = vadd.f32 %v161, %v670
    %v835 = vadd.f32 %v162, %v673
    %v836 = vadd.f32 %v163, %v678
    %v837 = vadd.f32 %v164, %v681
    %v838 = vadd.f32 %v165, %v686
    %v839 = vadd.f32 %v166, %v689
    %v840 = vadd.f32 %v167, %v694
    %v841 = vadd.f32 %v168, %v697
    %v842 = vadd.f32 %v169, %v702
    %v843 = vadd.f32 %v170, %v705
    %v844 = vadd.f32 %v171, %v710
    %v845 = vadd.f32 %v172, %v713
    %v846 = vadd.f32 %v173, %v718
    %v847 = vadd.f32 %v174, %v721
    %v848 = vadd.f32 %v175, %v726
    %v849 = vadd.f32 %v176, %v729
    %v850 = vadd.f32 %v177, %v734
    %v851 = vadd.f32 %v178, %v737
    %v852 = vadd.f32 %v179, %v742
    %v853 = vadd.f32 %v180, %v745
    %v854 = vadd.f32 %v181, %v750
    %v855 = vadd.f32 %v182, %v753
    %v856 = vadd.f32 %v183, %v758
    %v857 = vadd.f32 %v184, %v761
    %v858 = vadd.f32 %v185, %v766
    %v859 = vadd.f32 %v186, %v769
    %v860 = vadd.f32 %v187, %v774
    %v861 = vadd.f32 %v188, %v777
    %v862 = vadd.f32 %v189, %v782
    %v863 = vadd.f32 %v190, %v785
    %v864 = vadd.f32 %v191, %v790
    %v865 = vadd.f32 %v192, %v793
    %v866 = vadd.f32 %v193, %v798
    %v867 = vadd.f32 %v194, %v801
    %868 = vst [vmem:[#allocation2] sm:$0xff] %v804
    %869 = vst [vmem:[#allocation2 + $0x8] sm:$0xff] %v805
    %870 = vst [vmem:[#allocation2 + $0x10] sm:$0xff] %v806
    %871 = vst [vmem:[#allocation2 + $0x18] sm:$0xff] %v807
    %872 = vst [vmem:[#allocation2 + $0x20] sm:$0xff] %v808
    %873 = vst [vmem:[#allocation2 + $0x28] sm:$0xff] %v809
    %874 = vst [vmem:[#allocation2 + $0x30] sm:$0xff] %v810
    %875 = vst [vmem:[#allocation2 + $0x38] sm:$0xff] %v811
    %876 = vst [vmem:[#allocation2 + $0x40] sm:$0xff] %v812
    %877 = vst [vmem:[#allocation2 + $0x48] sm:$0xff] %v813
    %878 = vst [vmem:[#allocation2 + $0x50] sm:$0xff] %v814
    %879 = vst [vmem:[#allocation2 + $0x58] sm:$0xff] %v815
    %880 = vst [vmem:[#allocation2 + $0x60] sm:$0xff] %v816
    %881 = vst [vmem:[#allocation2 + $0x68] sm:$0xff] %v817
    %882 = vst [vmem:[#allocation2 + $0x70] sm:$0xff] %v818
    %883 = vst [vmem:[#allocation2 + $0x78] sm:$0xff] %v819
    %884 = vst [vmem:[#allocation2 + $0x80] sm:$0xff] %v820
    %885 = vst [vmem:[#allocation2 + $0x88] sm:$0xff] %v821
    %886 = vst [vmem:[#allocation2 + $0x90] sm:$0xff] %v822
    %887 = vst [vmem:[#allocation2 + $0x98] sm:$0xff] %v823
    %888 = vst [vmem:[#allocation2 + $0xa0] sm:$0xff] %v824
    %889 = vst [vmem:[#allocation2 + $0xa8] sm:$0xff] %v825
    %890 = vst [vmem:[#allocation2 + $0xb0] sm:$0xff] %v826
    %891 = vst [vmem:[#allocation2 + $0xb8] sm:$0xff] %v827
    %892 = vst [vmem:[#allocation2 + $0xc0] sm:$0xff] %v828
    %893 = vst [vmem:[#allocation2 + $0xc8] sm:$0xff] %v829
    %894 = vst [vmem:[#allocation2 + $0xd0] sm:$0xff] %v830
    %895 = vst [vmem:[#allocation2 + $0xd8] sm:$0xff] %v831
    %896 = vst [vmem:[#allocation2 + $0xe0] sm:$0xff] %v832
    %897 = vst [vmem:[#allocation2 + $0xe8] sm:$0xff] %v833
    %898 = vst [vmem:[#allocation2 + $0xf0] sm:$0xff] %v834
    %899 = vst [vmem:[#allocation2 + $0xf8] sm:$0xff] %v835
    %900 = vst [vmem:[#allocation2 + $0x100] sm:$0xff] %v836
    %901 = vst [vmem:[#allocation2 + $0x108] sm:$0xff] %v837
    %902 = vst [vmem:[#allocation2 + $0x110] sm:$0xff] %v838
    %903 = vst [vmem:[#allocation2 + $0x118] sm:$0xff] %v839
    %904 = vst [vmem:[#allocation2 + $0x120] sm:$0xff] %v840
    %905 = vst [vmem:[#allocation2 + $0x128] sm:$0xff] %v841
    %906 = vst [vmem:[#allocation2 + $0x130] sm:$0xff] %v842
    %907 = vst [vmem:[#allocation2 + $0x138] sm:$0xff] %v843
    %908 = vst [vmem:[#allocation2 + $0x140] sm:$0xff] %v844
    %909 = vst [vmem:[#allocation2 + $0x148] sm:$0xff] %v845
    %910 = vst [vmem:[#allocation2 + $0x150] sm:$0xff] %v846
    %911 = vst [vmem:[#allocation2 + $0x158] sm:$0xff] %v847
    %912 = vst [vmem:[#allocation2 + $0x160] sm:$0xff] %v848
    %913 = vst [vmem:[#allocation2 + $0x168] sm:$0xff] %v849
    %914 = vst [vmem:[#allocation2 + $0x170] sm:$0xff] %v850
    %915 = vst [vmem:[#allocation2 + $0x178] sm:$0xff] %v851
    %916 = vst [vmem:[#allocation2 + $0x180] sm:$0xff] %v852
    %917 = vst [vmem:[#allocation2 + $0x188] sm:$0xff] %v853
    %918 = vst [vmem:[#allocation2 + $0x190] sm:$0xff] %v854
    %919 = vst [vmem:[#allocation2 + $0x198] sm:$0xff] %v855
    %920 = vst [vmem:[#allocation2 + $0x1a0] sm:$0xff] %v856
    %921 = vst [vmem:[#allocation2 + $0x1a8] sm:$0xff] %v857
    %922 = vst [vmem:[#allocation2 + $0x1b0] sm:$0xff] %v858
    %923 = vst [vmem:[#allocation2 + $0x1b8] sm:$0xff] %v859
    %924 = vst [vmem:[#allocation2 + $0x1c0] sm:$0xff] %v860
    %925 = vst [vmem:[#allocation2 + $0x1c8] sm:$0xff] %v861
    %926 = vst [vmem:[#allocation2 + $0x1d0] sm:$0xff] %v862
    %927 = vst [vmem:[#allocation2 + $0x1d8] sm:$0xff] %v863
    %928 = vst [vmem:[#allocation2 + $0x1e0] sm:$0xff] %v864
    %929 = vst [vmem:[#allocation2 + $0x1e8] sm:$0xff] %v865
    %930 = vst [vmem:[#allocation2 + $0x1f0] sm:$0xff] %v866
    %931 = vst [vmem:[#allocation2 + $0x1f8] sm:$0xff] %v867
    // Predicated region
    $region38: #{tpu_custom_call.1} parent=1 // pred_check
      %p932 = pneg %p63
    $region39: #{tpu_custom_call.1} parent=1 // pred_check_branch
      %934 = sbr.rel (%p932) target = $region41
    $region40: #{tpu_custom_call.1} parent=1 // pred_region
      %v935 = vld [vmem:[#allocation2] sm:$0xff]
      %v936 = vld [vmem:[#allocation2 + $0x8] sm:$0xff]
      %v937 = vld [vmem:[#allocation2 + $0x10] sm:$0xff]
      %v938 = vld [vmem:[#allocation2 + $0x18] sm:$0xff]
      %v939 = vld [vmem:[#allocation2 + $0x20] sm:$0xff]
      %v940 = vld [vmem:[#allocation2 + $0x28] sm:$0xff]
      %v941 = vld [vmem:[#allocation2 + $0x30] sm:$0xff]
      %v942 = vld [vmem:[#allocation2 + $0x38] sm:$0xff]
      %v943 = vld [vmem:[#allocation2 + $0x40] sm:$0xff]
      %v944 = vld [vmem:[#allocation2 + $0x48] sm:$0xff]
      %v945 = vld [vmem:[#allocation2 + $0x50] sm:$0xff]
      %v946 = vld [vmem:[#allocation2 + $0x58] sm:$0xff]
      %v947 = vld [vmem:[#allocation2 + $0x60] sm:$0xff]
      %v948 = vld [vmem:[#allocation2 + $0x68] sm:$0xff]
      %v949 = vld [vmem:[#allocation2 + $0x70] sm:$0xff]
      %v950 = vld [vmem:[#allocation2 + $0x78] sm:$0xff]
      %v951 = vld [vmem:[#allocation2 + $0x80] sm:$0xff]
      %v952 = vld [vmem:[#allocation2 + $0x88] sm:$0xff]
      %v953 = vld [vmem:[#allocation2 + $0x90] sm:$0xff]
      %v954 = vld [vmem:[#allocation2 + $0x98] sm:$0xff]
      %v955 = vld [vmem:[#allocation2 + $0xa0] sm:$0xff]
      %v956 = vld [vmem:[#allocation2 + $0xa8] sm:$0xff]
      %v957 = vld [vmem:[#allocation2 + $0xb0] sm:$0xff]
      %v958 = vld [vmem:[#allocation2 + $0xb8] sm:$0xff]
      %v959 = vld [vmem:[#allocation2 + $0xc0] sm:$0xff]
      %v960 = vld [vmem:[#allocation2 + $0xc8] sm:$0xff]
      %v961 = vld [vmem:[#allocation2 + $0xd0] sm:$0xff]
      %v962 = vld [vmem:[#allocation2 + $0xd8] sm:$0xff]
      %v963 = vld [vmem:[#allocation2 + $0xe0] sm:$0xff]
      %v964 = vld [vmem:[#allocation2 + $0xe8] sm:$0xff]
      %v965 = vld [vmem:[#allocation2 + $0xf0] sm:$0xff]
      %v966 = vld [vmem:[#allocation2 + $0xf8] sm:$0xff]
      %v967 = vld [vmem:[#allocation2 + $0x100] sm:$0xff]
      %v968 = vld [vmem:[#allocation2 + $0x108] sm:$0xff]
      %v969 = vld [vmem:[#allocation2 + $0x110] sm:$0xff]
      %v970 = vld [vmem:[#allocation2 + $0x118] sm:$0xff]
      %v971 = vld [vmem:[#allocation2 + $0x120] sm:$0xff]
      %v972 = vld [vmem:[#allocation2 + $0x128] sm:$0xff]
      %v973 = vld [vmem:[#allocation2 + $0x130] sm:$0xff]
      %v974 = vld [vmem:[#allocation2 + $0x138] sm:$0xff]
      %v975 = vld [vmem:[#allocation2 + $0x140] sm:$0xff]
      %v976 = vld [vmem:[#allocation2 + $0x148] sm:$0xff]
      %v977 = vld [vmem:[#allocation2 + $0x150] sm:$0xff]
      %v978 = vld [vmem:[#allocation2 + $0x158] sm:$0xff]
      %v979 = vld [vmem:[#allocation2 + $0x160] sm:$0xff]
      %v980 = vld [vmem:[#allocation2 + $0x168] sm:$0xff]
      %v981 = vld [vmem:[#allocation2 + $0x170] sm:$0xff]
      %v982 = vld [vmem:[#allocation2 + $0x178] sm:$0xff]
      %v983 = vld [vmem:[#allocation2 + $0x180] sm:$0xff]
      %v984 = vld [vmem:[#allocation2 + $0x188] sm:$0xff]
      %v985 = vld [vmem:[#allocation2 + $0x190] sm:$0xff]
      %v986 = vld [vmem:[#allocation2 + $0x198] sm:$0xff]
      %v987 = vld [vmem:[#allocation2 + $0x1a0] sm:$0xff]
      %v988 = vld [vmem:[#allocation2 + $0x1a8] sm:$0xff]
      %v989 = vld [vmem:[#allocation2 + $0x1b0] sm:$0xff]
      %v990 = vld [vmem:[#allocation2 + $0x1b8] sm:$0xff]
      %v991 = vld [vmem:[#allocation2 + $0x1c0] sm:$0xff]
      %v992 = vld [vmem:[#allocation2 + $0x1c8] sm:$0xff]
      %v993 = vld [vmem:[#allocation2 + $0x1d0] sm:$0xff]
      %v994 = vld [vmem:[#allocation2 + $0x1d8] sm:$0xff]
      %v995 = vld [vmem:[#allocation2 + $0x1e0] sm:$0xff]
      %v996 = vld [vmem:[#allocation2 + $0x1e8] sm:$0xff]
      %v997 = vld [vmem:[#allocation2 + $0x1f0] sm:$0xff]
      %v998 = vld [vmem:[#allocation2 + $0x1f8] sm:$0xff]
      %v999 = vld [vmem:[%s2] sm:$0x1]
      %v1001 = vlaneseq
      %v1002 = vshrl.u32 %v1001, 7
      %v1003 = vsub.s32 0, %v1002
      %v1004 = vrot.slane %v999, %v1003
      %v1006 = vadd.f32 %v935, %v1004
      %v1007 = vadd.f32 %v936, %v1004
      %v1008 = vadd.f32 %v937, %v1004
      %v1009 = vadd.f32 %v938, %v1004
      %v1010 = vadd.f32 %v939, %v1004
      %v1011 = vadd.f32 %v940, %v1004
      %v1012 = vadd.f32 %v941, %v1004
      %v1013 = vadd.f32 %v942, %v1004
      %v1014 = vadd.f32 %v943, %v1004
      %v1015 = vadd.f32 %v944, %v1004
      %v1016 = vadd.f32 %v945, %v1004
      %v1017 = vadd.f32 %v946, %v1004
      %v1018 = vadd.f32 %v947, %v1004
      %v1019 = vadd.f32 %v948, %v1004
      %v1020 = vadd.f32 %v949, %v1004
      %v1021 = vadd.f32 %v950, %v1004
      %v1022 = vadd.f32 %v951, %v1004
      %v1023 = vadd.f32 %v952, %v1004
      %v1024 = vadd.f32 %v953, %v1004
      %v1025 = vadd.f32 %v954, %v1004
      %v1026 = vadd.f32 %v955, %v1004
      %v1027 = vadd.f32 %v956, %v1004
      %v1028 = vadd.f32 %v957, %v1004
      %v1029 = vadd.f32 %v958, %v1004
      %v1030 = vadd.f32 %v959, %v1004
      %v1031 = vadd.f32 %v960, %v1004
      %v1032 = vadd.f32 %v961, %v1004
      %v1033 = vadd.f32 %v962, %v1004
      %v1034 = vadd.f32 %v963, %v1004
      %v1035 = vadd.f32 %v964, %v1004
      %v1036 = vadd.f32 %v965, %v1004
      %v1037 = vadd.f32 %v966, %v1004
      %v1038 = vadd.f32 %v967, %v1004
      %v1039 = vadd.f32 %v968, %v1004
      %v1040 = vadd.f32 %v969, %v1004
      %v1041 = vadd.f32 %v970, %v1004
      %v1042 = vadd.f32 %v971, %v1004
      %v1043 = vadd.f32 %v972, %v1004
      %v1044 = vadd.f32 %v973, %v1004
      %v1045 = vadd.f32 %v974, %v1004
      %v1046 = vadd.f32 %v975, %v1004
      %v1047 = vadd.f32 %v976, %v1004
      %v1048 = vadd.f32 %v977, %v1004
      %v1049 = vadd.f32 %v978, %v1004
      %v1050 = vadd.f32 %v979, %v1004
      %v1051 = vadd.f32 %v980, %v1004
      %v1052 = vadd.f32 %v981, %v1004
      %v1053 = vadd.f32 %v982, %v1004
      %v1054 = vadd.f32 %v983, %v1004
      %v1055 = vadd.f32 %v984, %v1004
      %v1056 = vadd.f32 %v985, %v1004
      %v1057 = vadd.f32 %v986, %v1004
      %v1058 = vadd.f32 %v987, %v1004
      %v1059 = vadd.f32 %v988, %v1004
      %v1060 = vadd.f32 %v989, %v1004
      %v1061 = vadd.f32 %v990, %v1004
      %v1062 = vadd.f32 %v991, %v1004
      %v1063 = vadd.f32 %v992, %v1004
      %v1064 = vadd.f32 %v993, %v1004
      %v1065 = vadd.f32 %v994, %v1004
      %v1066 = vadd.f32 %v995, %v1004
      %v1067 = vadd.f32 %v996, %v1004
      %v1068 = vadd.f32 %v997, %v1004
      %v1069 = vadd.f32 %v998, %v1004
      %v1070 = vmax.f32 %v1006, 0.0
      %v1071 = vmax.f32 %v1007, 0.0
      %v1072 = vmax.f32 %v1008, 0.0
      %v1073 = vmax.f32 %v1009, 0.0
      %v1074 = vmax.f32 %v1010, 0.0
      %v1075 = vmax.f32 %v1011, 0.0
      %v1076 = vmax.f32 %v1012, 0.0
      %v1077 = vmax.f32 %v1013, 0.0
      %v1078 = vmax.f32 %v1014, 0.0
      %v1079 = vmax.f32 %v1015, 0.0
      %v1080 = vmax.f32 %v1016, 0.0
      %v1081 = vmax.f32 %v1017, 0.0
      %v1082 = vmax.f32 %v1018, 0.0
      %v1083 = vmax.f32 %v1019, 0.0
      %v1084 = vmax.f32 %v1020, 0.0
      %v1085 = vmax.f32 %v1021, 0.0
      %v1086 = vmax.f32 %v1022, 0.0
      %v1087 = vmax.f32 %v1023, 0.0
      %v1088 = vmax.f32 %v1024, 0.0
      %v1089 = vmax.f32 %v1025, 0.0
      %v1090 = vmax.f32 %v1026, 0.0
      %v1091 = vmax.f32 %v1027, 0.0
      %v1092 = vmax.f32 %v1028, 0.0
      %v1093 = vmax.f32 %v1029, 0.0
      %v1094 = vmax.f32 %v1030, 0.0
      %v1095 = vmax.f32 %v1031, 0.0
      %v1096 = vmax.f32 %v1032, 0.0
      %v1097 = vmax.f32 %v1033, 0.0
      %v1098 = vmax.f32 %v1034, 0.0
      %v1099 = vmax.f32 %v1035, 0.0
      %v1100 = vmax.f32 %v1036, 0.0
      %v1101 = vmax.f32 %v1037, 0.0
      %v1102 = vmax.f32 %v1038, 0.0
      %v1103 = vmax.f32 %v1039, 0.0
      %v1104 = vmax.f32 %v1040, 0.0
      %v1105 = vmax.f32 %v1041, 0.0
      %v1106 = vmax.f32 %v1042, 0.0
      %v1107 = vmax.f32 %v1043, 0.0
      %v1108 = vmax.f32 %v1044, 0.0
      %v1109 = vmax.f32 %v1045, 0.0
      %v1110 = vmax.f32 %v1046, 0.0
      %v1111 = vmax.f32 %v1047, 0.0
      %v1112 = vmax.f32 %v1048, 0.0
      %v1113 = vmax.f32 %v1049, 0.0
      %v1114 = vmax.f32 %v1050, 0.0
      %v1115 = vmax.f32 %v1051, 0.0
      %v1116 = vmax.f32 %v1052, 0.0
      %v1117 = vmax.f32 %v1053, 0.0
      %v1118 = vmax.f32 %v1054, 0.0
      %v1119 = vmax.f32 %v1055, 0.0
      %v1120 = vmax.f32 %v1056, 0.0
      %v1121 = vmax.f32 %v1057, 0.0
      %v1122 = vmax.f32 %v1058, 0.0
      %v1123 = vmax.f32 %v1059, 0.0
      %v1124 = vmax.f32 %v1060, 0.0
      %v1125 = vmax.f32 %v1061, 0.0
      %v1126 = vmax.f32 %v1062, 0.0
      %v1127 = vmax.f32 %v1063, 0.0
      %v1128 = vmax.f32 %v1064, 0.0
      %v1129 = vmax.f32 %v1065, 0.0
      %v1130 = vmax.f32 %v1066, 0.0
      %v1131 = vmax.f32 %v1067, 0.0
      %v1132 = vmax.f32 %v1068, 0.0
      %v1133 = vmax.f32 %v1069, 0.0
      %v1134 = vpack.c.bf16 %v1071, %v1070
      %v1135 = vpack.c.bf16 %v1073, %v1072
      %v1136 = vpack.c.bf16 %v1075, %v1074
      %v1137 = vpack.c.bf16 %v1077, %v1076
      %v1138 = vpack.c.bf16 %v1079, %v1078
      %v1139 = vpack.c.bf16 %v1081, %v1080
      %v1140 = vpack.c.bf16 %v1083, %v1082
      %v1141 = vpack.c.bf16 %v1085, %v1084
      %v1142 = vpack.c.bf16 %v1087, %v1086
      %v1143 = vpack.c.bf16 %v1089, %v1088
      %v1144 = vpack.c.bf16 %v1091, %v1090
      %v1145 = vpack.c.bf16 %v1093, %v1092
      %v1146 = vpack.c.bf16 %v1095, %v1094
      %v1147 = vpack.c.bf16 %v1097, %v1096
      %v1148 = vpack.c.bf16 %v1099, %v1098
      %v1149 = vpack.c.bf16 %v1101, %v1100
      %v1150 = vpack.c.bf16 %v1103, %v1102
      %v1151 = vpack.c.bf16 %v1105, %v1104
      %v1152 = vpack.c.bf16 %v1107, %v1106
      %v1153 = vpack.c.bf16 %v1109, %v1108
      %v1154 = vpack.c.bf16 %v1111, %v1110
      %v1155 = vpack.c.bf16 %v1113, %v1112
      %v1156 = vpack.c.bf16 %v1115, %v1114
      %v1157 = vpack.c.bf16 %v1117, %v1116
      %v1158 = vpack.c.bf16 %v1119, %v1118
      %v1159 = vpack.c.bf16 %v1121, %v1120
      %v1160 = vpack.c.bf16 %v1123, %v1122
      %v1161 = vpack.c.bf16 %v1125, %v1124
      %v1162 = vpack.c.bf16 %v1127, %v1126
      %v1163 = vpack.c.bf16 %v1129, %v1128
      %v1164 = vpack.c.bf16 %v1131, %v1130
      %v1165 = vpack.c.bf16 %v1133, %v1132
      %v1166 = vld [vmem:[#allocation8] sm:$0xf]
      %v1167 = vld [vmem:[#allocation8 + $0x4] sm:$0xf]
      %v1168 = vld [vmem:[#allocation8 + $0x8] sm:$0xf]
      %v1169 = vld [vmem:[#allocation8 + $0xc] sm:$0xf]
      %v1170 = vld [vmem:[#allocation8 + $0x10] sm:$0xf]
      %v1171 = vld [vmem:[#allocation8 + $0x14] sm:$0xf]
      %v1172 = vld [vmem:[#allocation8 + $0x18] sm:$0xf]
      %v1173 = vld [vmem:[#allocation8 + $0x1c] sm:$0xf]
      %v1174 = vld [vmem:[#allocation8 + $0x20] sm:$0xf]
      %v1175 = vld [vmem:[#allocation8 + $0x24] sm:$0xf]
      %v1176 = vld [vmem:[#allocation8 + $0x28] sm:$0xf]
      %v1177 = vld [vmem:[#allocation8 + $0x2c] sm:$0xf]
      %v1178 = vld [vmem:[#allocation8 + $0x30] sm:$0xf]
      %v1179 = vld [vmem:[#allocation8 + $0x34] sm:$0xf]
      %v1180 = vld [vmem:[#allocation8 + $0x38] sm:$0xf]
      %v1181 = vld [vmem:[#allocation8 + $0x3c] sm:$0xf]
      %v1182 = vld [vmem:[%s4] sm:$0x1]
      %v1184 = vlaneseq
      %v1185 = vshrl.u32 %v1184, 7
      %v1186 = vsub.s32 0, %v1185
      %v1187 = vrot.slane %v1182, %v1186
      %v1205 = vunpack.c.l.b16 %v1166
      %v1206 = vunpack.c.l.b16 %v1167
      %v1207 = vunpack.c.l.b16 %v1168
      %v1208 = vunpack.c.l.b16 %v1169
      %v1209 = vunpack.c.l.b16 %v1170
      %v1210 = vunpack.c.l.b16 %v1171
      %v1211 = vunpack.c.l.b16 %v1172
      %v1212 = vunpack.c.l.b16 %v1173
      %v1213 = vunpack.c.l.b16 %v1174
      %v1214 = vunpack.c.l.b16 %v1175
      %v1215 = vunpack.c.l.b16 %v1176
      %v1216 = vunpack.c.l.b16 %v1177
      %v1217 = vunpack.c.l.b16 %v1178
      %v1218 = vunpack.c.l.b16 %v1179
      %v1219 = vunpack.c.l.b16 %v1180
      %v1220 = vunpack.c.l.b16 %v1181
      %v1221 = vpack.c.b16 %v1206, %v1205
      %v1222 = vpack.c.b16 %v1208, %v1207
      %v1223 = vpack.c.b16 %v1210, %v1209
      %v1224 = vpack.c.b16 %v1212, %v1211
      %v1225 = vpack.c.b16 %v1214, %v1213
      %v1226 = vpack.c.b16 %v1216, %v1215
      %v1227 = vpack.c.b16 %v1218, %v1217
      %v1228 = vpack.c.b16 %v1220, %v1219
      %1237 = vmatprep.subr.bf16.mxu0 0
      %1238 = vmatpush1.bf16.msra.mxu0 %v1221
      %1239 = vmatprep.subr.bf16.mxu0 0
      %1240 = vmatpush1.bf16.msra.mxu0 %v1222
      %1241 = vmatprep.subr.bf16.mxu0 0
      %1242 = vmatpush1.bf16.msra.mxu0 %v1223
      %1243 = vmatprep.subr.bf16.mxu0 0
      %1244 = vmatpush1.bf16.msra.mxu0 %v1224
      %1245 = vmatprep.subr.bf16.mxu0 0
      %1246 = vmatpush1.bf16.msra.mxu0 %v1225
      %1247 = vmatprep.subr.bf16.mxu0 0
      %1248 = vmatpush1.bf16.msra.mxu0 %v1226
      %1249 = vmatprep.subr.bf16.mxu0 0
      %1250 = vmatpush1.bf16.msra.mxu0 %v1227
      %1251 = vmatprep.subr.bf16.mxu0 0
      %1252 = vmatpush1.bf16.msra.mxu0 %v1228
      %1253 = vmatprep.subr.bf16.mxu0 0
      %1254 = vmatpush1.bf16.msra.mxu0 0
      %1255 = vmatprep.subr.bf16.mxu0 0
      %1256 = vmatpush1.bf16.msra.mxu0 0
      %1257 = vmatprep.subr.bf16.mxu0 0
      %1258 = vmatpush1.bf16.msra.mxu0 0
      %1259 = vmatprep.subr.bf16.mxu0 0
      %1260 = vmatpush1.bf16.msra.mxu0 0
      %1261 = vmatprep.subr.bf16.mxu0 0
      %1262 = vmatpush1.bf16.msra.mxu0 0
      %1263 = vmatprep.subr.bf16.mxu0 0
      %1264 = vmatpush1.bf16.msra.mxu0 0
      %1265 = vmatprep.subr.bf16.mxu0 0
      %1266 = vmatpush1.bf16.msra.mxu0 0
      %1267 = vmatprep.subr.bf16.mxu0 0
      %1268 = vmatpush1.bf16.msra.mxu0 0
      %1269 = vmatprep.mubr.bf16.mxu0 0
      %1270 = vmatmul.mubr.bf16.gmra.mrb[0].mxu0 %v1134
      %v1271 = vpop.f32.mrb[0].mxu0
      %v1272 = vadd.f32 %v1187, %v1271
      %v1273 = vpop.f32.mrb[0].mxu0
      %v1274 = vpop.f32.mrb[0].mxu0
      %v1275 = vadd.f32 %v1187, %v1274
      %v1276 = vpop.f32.mrb[0].mxu0
      %1277 = vmatprep.mubr.bf16.mxu0 0
      %1278 = vmatmul.mubr.bf16.gmra.mrb[0].mxu0 %v1135
      %v1279 = vpop.f32.mrb[0].mxu0
      %v1280 = vadd.f32 %v1187, %v1279
      %v1281 = vpop.f32.mrb[0].mxu0
      %v1282 = vpop.f32.mrb[0].mxu0
      %v1283 = vadd.f32 %v1187, %v1282
      %v1284 = vpop.f32.mrb[0].mxu0
      %1285 = vmatprep.mubr.bf16.mxu0 0
      %1286 = vmatmul.mubr.bf16.gmra.mrb[0].mxu0 %v1136
      %v1287 = vpop.f32.mrb[0].mxu0
      %v1288 = vadd.f32 %v1187, %v1287
      %v1289 = vpop.f32.mrb[0].mxu0
      %v1290 = vpop.f32.mrb[0].mxu0
      %v1291 = vadd.f32 %v1187, %v1290
      %v1292 = vpop.f32.mrb[0].mxu0
      %1293 = vmatprep.mubr.bf16.mxu0 0
      %1294 = vmatmul.mubr.bf16.gmra.mrb[0].mxu0 %v1137
      %v1295 = vpop.f32.mrb[0].mxu0
      %v1296 = vadd.f32 %v1187, %v1295
      %v1297 = vpop.f32.mrb[0].mxu0
      %v1298 = vpop.f32.mrb[0].mxu0
      %v1299 = vadd.f32 %v1187, %v1298
      %v1300 = vpop.f32.mrb[0].mxu0
      %1301 = vmatprep.mubr.bf16.mxu0 0
      %1302 = vmatmul.mubr.bf16.gmra.mrb[0].mxu0 %v1138
      %v1303 = vpop.f32.mrb[0].mxu0
      %v1304 = vadd.f32 %v1187, %v1303
      %v1305 = vpop.f32.mrb[0].mxu0
      %v1306 = vpop.f32.mrb[0].mxu0
      %v1307 = vadd.f32 %v1187, %v1306
      %v1308 = vpop.f32.mrb[0].mxu0
      %1309 = vmatprep.mubr.bf16.mxu0 0
      %1310 = vmatmul.mubr.bf16.gmra.mrb[0].mxu0 %v1139
      %v1311 = vpop.f32.mrb[0].mxu0
      %v1312 = vadd.f32 %v1187, %v1311
      %v1313 = vpop.f32.mrb[0].mxu0
      %v1314 = vpop.f32.mrb[0].mxu0
      %v1315 = vadd.f32 %v1187, %v1314
      %v1316 = vpop.f32.mrb[0].mxu0
      %1317 = vmatprep.mubr.bf16.mxu0 0
      %1318 = vmatmul.mubr.bf16.gmra.mrb[0].mxu0 %v1140
      %v1319 = vpop.f32.mrb[0].mxu0
      %v1320 = vadd.f32 %v1187, %v1319
      %v1321 = vpop.f32.mrb[0].mxu0
      %v1322 = vpop.f32.mrb[0].mxu0
      %v1323 = vadd.f32 %v1187, %v1322
      %v1324 = vpop.f32.mrb[0].mxu0
      %1325 = vmatprep.mubr.bf16.mxu0 0
      %1326 = vmatmul.mubr.bf16.gmra.mrb[0].mxu0 %v1141
      %v1327 = vpop.f32.mrb[0].mxu0
      %v1328 = vadd.f32 %v1187, %v1327
      %v1329 = vpop.f32.mrb[0].mxu0
      %v1330 = vpop.f32.mrb[0].mxu0
      %v1331 = vadd.f32 %v1187, %v1330
      %v1332 = vpop.f32.mrb[0].mxu0
      %1333 = vmatprep.mubr.bf16.mxu0 0
      %1334 = vmatmul.mubr.bf16.gmra.mrb[0].mxu0 %v1142
      %v1335 = vpop.f32.mrb[0].mxu0
      %v1336 = vadd.f32 %v1187, %v1335
      %v1337 = vpop.f32.mrb[0].mxu0
      %v1338 = vpop.f32.mrb[0].mxu0
      %v1339 = vadd.f32 %v1187, %v1338
      %v1340 = vpop.f32.mrb[0].mxu0
      %1341 = vmatprep.mubr.bf16.mxu0 0
      %1342 = vmatmul.mubr.bf16.gmra.mrb[0].mxu0 %v1143
      %v1343 = vpop.f32.mrb[0].mxu0
      %v1344 = vadd.f32 %v1187, %v1343
      %v1345 = vpop.f32.mrb[0].mxu0
      %v1346 = vpop.f32.mrb[0].mxu0
      %v1347 = vadd.f32 %v1187, %v1346
      %v1348 = vpop.f32.mrb[0].mxu0
      %1349 = vmatprep.mubr.bf16.mxu0 0
      %1350 = vmatmul.mubr.bf16.gmra.mrb[0].mxu0 %v1144
      %v1351 = vpop.f32.mrb[0].mxu0
      %v1352 = vadd.f32 %v1187, %v1351
      %v1353 = vpop.f32.mrb[0].mxu0
      %v1354 = vpop.f32.mrb[0].mxu0
      %v1355 = vadd.f32 %v1187, %v1354
      %v1356 = vpop.f32.mrb[0].mxu0
      %1357 = vmatprep.mubr.bf16.mxu0 0
      %1358 = vmatmul.mubr.bf16.gmra.mrb[0].mxu0 %v1145
      %v1359 = vpop.f32.mrb[0].mxu0
      %v1360 = vadd.f32 %v1187, %v1359
      %v1361 = vpop.f32.mrb[0].mxu0
      %v1362 = vpop.f32.mrb[0].mxu0
      %v1363 = vadd.f32 %v1187, %v1362
      %v1364 = vpop.f32.mrb[0].mxu0
      %1365 = vmatprep.mubr.bf16.mxu0 0
      %1366 = vmatmul.mubr.bf16.gmra.mrb[0].mxu0 %v1146
      %v1367 = vpop.f32.mrb[0].mxu0
      %v1368 = vadd.f32 %v1187, %v1367
      %v1369 = vpop.f32.mrb[0].mxu0
      %v1370 = vpop.f32.mrb[0].mxu0
      %v1371 = vadd.f32 %v1187, %v1370
      %v1372 = vpop.f32.mrb[0].mxu0
      %1373 = vmatprep.mubr.bf16.mxu0 0
      %1374 = vmatmul.mubr.bf16.gmra.mrb[0].mxu0 %v1147
      %v1375 = vpop.f32.mrb[0].mxu0
      %v1376 = vadd.f32 %v1187, %v1375
      %v1377 = vpop.f32.mrb[0].mxu0
      %v1378 = vpop.f32.mrb[0].mxu0
      %v1379 = vadd.f32 %v1187, %v1378
      %v1380 = vpop.f32.mrb[0].mxu0
      %1381 = vmatprep.mubr.bf16.mxu0 0
      %1382 = vmatmul.mubr.bf16.gmra.mrb[0].mxu0 %v1148
      %v1383 = vpop.f32.mrb[0].mxu0
      %v1384 = vadd.f32 %v1187, %v1383
      %v1385 = vpop.f32.mrb[0].mxu0
      %v1386 = vpop.f32.mrb[0].mxu0
      %v1387 = vadd.f32 %v1187, %v1386
      %v1388 = vpop.f32.mrb[0].mxu0
      %1389 = vmatprep.mubr.bf16.mxu0 0
      %1390 = vmatmul.mubr.bf16.gmra.mrb[0].mxu0 %v1149
      %v1391 = vpop.f32.mrb[0].mxu0
      %v1392 = vadd.f32 %v1187, %v1391
      %v1393 = vpop.f32.mrb[0].mxu0
      %v1394 = vpop.f32.mrb[0].mxu0
      %v1395 = vadd.f32 %v1187, %v1394
      %v1396 = vpop.f32.mrb[0].mxu0
      %1397 = vmatprep.mubr.bf16.mxu0 0
      %1398 = vmatmul.mubr.bf16.gmra.mrb[0].mxu0 %v1150
      %v1399 = vpop.f32.mrb[0].mxu0
      %v1400 = vadd.f32 %v1187, %v1399
      %v1401 = vpop.f32.mrb[0].mxu0
      %v1402 = vpop.f32.mrb[0].mxu0
      %v1403 = vadd.f32 %v1187, %v1402
      %v1404 = vpop.f32.mrb[0].mxu0
      %1405 = vmatprep.mubr.bf16.mxu0 0
      %1406 = vmatmul.mubr.bf16.gmra.mrb[0].mxu0 %v1151
      %v1407 = vpop.f32.mrb[0].mxu0
      %v1408 = vadd.f32 %v1187, %v1407
      %v1409 = vpop.f32.mrb[0].mxu0
      %v1410 = vpop.f32.mrb[0].mxu0
      %v1411 = vadd.f32 %v1187, %v1410
      %v1412 = vpop.f32.mrb[0].mxu0
      %1413 = vmatprep.mubr.bf16.mxu0 0
      %1414 = vmatmul.mubr.bf16.gmra.mrb[0].mxu0 %v1152
      %v1415 = vpop.f32.mrb[0].mxu0
      %v1416 = vadd.f32 %v1187, %v1415
      %v1417 = vpop.f32.mrb[0].mxu0
      %v1418 = vpop.f32.mrb[0].mxu0
      %v1419 = vadd.f32 %v1187, %v1418
      %v1420 = vpop.f32.mrb[0].mxu0
      %1421 = vmatprep.mubr.bf16.mxu0 0
      %1422 = vmatmul.mubr.bf16.gmra.mrb[0].mxu0 %v1153
      %v1423 = vpop.f32.mrb[0].mxu0
      %v1424 = vadd.f32 %v1187, %v1423
      %v1425 = vpop.f32.mrb[0].mxu0
      %v1426 = vpop.f32.mrb[0].mxu0
      %v1427 = vadd.f32 %v1187, %v1426
      %v1428 = vpop.f32.mrb[0].mxu0
      %1429 = vmatprep.mubr.bf16.mxu0 0
      %1430 = vmatmul.mubr.bf16.gmra.mrb[0].mxu0 %v1154
      %v1431 = vpop.f32.mrb[0].mxu0
      %v1432 = vadd.f32 %v1187, %v1431
      %v1433 = vpop.f32.mrb[0].mxu0
      %v1434 = vpop.f32.mrb[0].mxu0
      %v1435 = vadd.f32 %v1187, %v1434
      %v1436 = vpop.f32.mrb[0].mxu0
      %1437 = vmatprep.mubr.bf16.mxu0 0
      %1438 = vmatmul.mubr.bf16.gmra.mrb[0].mxu0 %v1155
      %v1439 = vpop.f32.mrb[0].mxu0
      %v1440 = vadd.f32 %v1187, %v1439
      %v1441 = vpop.f32.mrb[0].mxu0
      %v1442 = vpop.f32.mrb[0].mxu0
      %v1443 = vadd.f32 %v1187, %v1442
      %v1444 = vpop.f32.mrb[0].mxu0
      %1445 = vmatprep.mubr.bf16.mxu0 0
      %1446 = vmatmul.mubr.bf16.gmra.mrb[0].mxu0 %v1156
      %v1447 = vpop.f32.mrb[0].mxu0
      %v1448 = vadd.f32 %v1187, %v1447
      %v1449 = vpop.f32.mrb[0].mxu0
      %v1450 = vpop.f32.mrb[0].mxu0
      %v1451 = vadd.f32 %v1187, %v1450
      %v1452 = vpop.f32.mrb[0].mxu0
      %1453 = vmatprep.mubr.bf16.mxu0 0
      %1454 = vmatmul.mubr.bf16.gmra.mrb[0].mxu0 %v1157
      %v1455 = vpop.f32.mrb[0].mxu0
      %v1456 = vadd.f32 %v1187, %v1455
      %v1457 = vpop.f32.mrb[0].mxu0
      %v1458 = vpop.f32.mrb[0].mxu0
      %v1459 = vadd.f32 %v1187, %v1458
      %v1460 = vpop.f32.mrb[0].mxu0
      %1461 = vmatprep.mubr.bf16.mxu0 0
      %1462 = vmatmul.mubr.bf16.gmra.mrb[0].mxu0 %v1158
      %v1463 = vpop.f32.mrb[0].mxu0
      %v1464 = vadd.f32 %v1187, %v1463
      %v1465 = vpop.f32.mrb[0].mxu0
      %v1466 = vpop.f32.mrb[0].mxu0
      %v1467 = vadd.f32 %v1187, %v1466
      %v1468 = vpop.f32.mrb[0].mxu0
      %1469 = vmatprep.mubr.bf16.mxu0 0
      %1470 = vmatmul.mubr.bf16.gmra.mrb[0].mxu0 %v1159
      %v1471 = vpop.f32.mrb[0].mxu0
      %v1472 = vadd.f32 %v1187, %v1471
      %v1473 = vpop.f32.mrb[0].mxu0
      %v1474 = vpop.f32.mrb[0].mxu0
      %v1475 = vadd.f32 %v1187, %v1474
      %v1476 = vpop.f32.mrb[0].mxu0
      %1477 = vmatprep.mubr.bf16.mxu0 0
      %1478 = vmatmul.mubr.bf16.gmra.mrb[0].mxu0 %v1160
      %v1479 = vpop.f32.mrb[0].mxu0
      %v1480 = vadd.f32 %v1187, %v1479
      %v1481 = vpop.f32.mrb[0].mxu0
      %v1482 = vpop.f32.mrb[0].mxu0
      %v1483 = vadd.f32 %v1187, %v1482
      %v1484 = vpop.f32.mrb[0].mxu0
      %1485 = vmatprep.mubr.bf16.mxu0 0
      %1486 = vmatmul.mubr.bf16.gmra.mrb[0].mxu0 %v1161
      %v1487 = vpop.f32.mrb[0].mxu0
      %v1488 = vadd.f32 %v1187, %v1487
      %v1489 = vpop.f32.mrb[0].mxu0
      %v1490 = vpop.f32.mrb[0].mxu0
      %v1491 = vadd.f32 %v1187, %v1490
      %v1492 = vpop.f32.mrb[0].mxu0
      %1493 = vmatprep.mubr.bf16.mxu0 0
      %1494 = vmatmul.mubr.bf16.gmra.mrb[0].mxu0 %v1162
      %v1495 = vpop.f32.mrb[0].mxu0
      %v1496 = vadd.f32 %v1187, %v1495
      %v1497 = vpop.f32.mrb[0].mxu0
      %v1498 = vpop.f32.mrb[0].mxu0
      %v1499 = vadd.f32 %v1187, %v1498
      %v1500 = vpop.f32.mrb[0].mxu0
      %1501 = vmatprep.mubr.bf16.mxu0 0
      %1502 = vmatmul.mubr.bf16.gmra.mrb[0].mxu0 %v1163
      %v1503 = vpop.f32.mrb[0].mxu0
      %v1504 = vadd.f32 %v1187, %v1503
      %v1505 = vpop.f32.mrb[0].mxu0
      %v1506 = vpop.f32.mrb[0].mxu0
      %v1507 = vadd.f32 %v1187, %v1506
      %v1508 = vpop.f32.mrb[0].mxu0
      %1509 = vmatprep.mubr.bf16.mxu0 0
      %1510 = vmatmul.mubr.bf16.gmra.mrb[0].mxu0 %v1164
      %v1511 = vpop.f32.mrb[0].mxu0
      %v1512 = vadd.f32 %v1187, %v1511
      %v1513 = vpop.f32.mrb[0].mxu0
      %v1514 = vpop.f32.mrb[0].mxu0
      %v1515 = vadd.f32 %v1187, %v1514
      %v1516 = vpop.f32.mrb[0].mxu0
      %1517 = vmatprep.mubr.bf16.mxu0 0
      %1518 = vmatmul.mubr.bf16.gmra.mrb[0].mxu0 %v1165
      %v1519 = vpop.f32.mrb[0].mxu0
      %v1520 = vadd.f32 %v1187, %v1519
      %v1521 = vpop.f32.mrb[0].mxu0
      %v1522 = vpop.f32.mrb[0].mxu0
      %v1523 = vadd.f32 %v1187, %v1522
      %v1524 = vpop.f32.mrb[0].mxu0
      %1525 = vdwg.mxu0
      %v1526 = vpack.c.bf16 %v1275, %v1272
      %v1527 = vpack.c.bf16 %v1283, %v1280
      %v1528 = vpack.c.bf16 %v1291, %v1288
      %v1529 = vpack.c.bf16 %v1299, %v1296
      %v1530 = vpack.c.bf16 %v1307, %v1304
      %v1531 = vpack.c.bf16 %v1315, %v1312
      %v1532 = vpack.c.bf16 %v1323, %v1320
      %v1533 = vpack.c.bf16 %v1331, %v1328
      %v1534 = vpack.c.bf16 %v1339, %v1336
      %v1535 = vpack.c.bf16 %v1347, %v1344
      %v1536 = vpack.c.bf16 %v1355, %v1352
      %v1537 = vpack.c.bf16 %v1363, %v1360
      %v1538 = vpack.c.bf16 %v1371, %v1368
      %v1539 = vpack.c.bf16 %v1379, %v1376
      %v1540 = vpack.c.bf16 %v1387, %v1384
      %v1541 = vpack.c.bf16 %v1395, %v1392
      %v1542 = vpack.c.bf16 %v1403, %v1400
      %v1543 = vpack.c.bf16 %v1411, %v1408
      %v1544 = vpack.c.bf16 %v1419, %v1416
      %v1545 = vpack.c.bf16 %v1427, %v1424
      %v1546 = vpack.c.bf16 %v1435, %v1432
      %v1547 = vpack.c.bf16 %v1443, %v1440
      %v1548 = vpack.c.bf16 %v1451, %v1448
      %v1549 = vpack.c.bf16 %v1459, %v1456
      %v1550 = vpack.c.bf16 %v1467, %v1464
      %v1551 = vpack.c.bf16 %v1475, %v1472
      %v1552 = vpack.c.bf16 %v1483, %v1480
      %v1553 = vpack.c.bf16 %v1491, %v1488
      %v1554 = vpack.c.bf16 %v1499, %v1496
      %v1555 = vpack.c.bf16 %v1507, %v1504
      %v1556 = vpack.c.bf16 %v1515, %v1512
      %v1557 = vpack.c.bf16 %v1523, %v1520
      %v1590 = vunpack.c.l.b16 %v1526
      %v1591 = vunpack.c.h.b16 %v1526
      %v1592 = vunpack.c.l.b16 %v1527
      %v1593 = vunpack.c.h.b16 %v1527
      %v1594 = vunpack.c.l.b16 %v1528
      %v1595 = vunpack.c.h.b16 %v1528
      %v1596 = vunpack.c.l.b16 %v1529
      %v1597 = vunpack.c.h.b16 %v1529
      %v1598 = vunpack.c.l.b16 %v1530
      %v1599 = vunpack.c.h.b16 %v1530
      %v1600 = vunpack.c.l.b16 %v1531
      %v1601 = vunpack.c.h.b16 %v1531
      %v1602 = vunpack.c.l.b16 %v1532
      %v1603 = vunpack.c.h.b16 %v1532
      %v1604 = vunpack.c.l.b16 %v1533
      %v1605 = vunpack.c.h.b16 %v1533
      %v1606 = vunpack.c.l.b16 %v1534
      %v1607 = vunpack.c.h.b16 %v1534
      %v1608 = vunpack.c.l.b16 %v1535
      %v1609 = vunpack.c.h.b16 %v1535
      %v1610 = vunpack.c.l.b16 %v1536
      %v1611 = vunpack.c.h.b16 %v1536
      %v1612 = vunpack.c.l.b16 %v1537
      %v1613 = vunpack.c.h.b16 %v1537
      %v1614 = vunpack.c.l.b16 %v1538
      %v1615 = vunpack.c.h.b16 %v1538
      %v1616 = vunpack.c.l.b16 %v1539
      %v1617 = vunpack.c.h.b16 %v1539
      %v1618 = vunpack.c.l.b16 %v1540
      %v1619 = vunpack.c.h.b16 %v1540
      %v1620 = vunpack.c.l.b16 %v1541
      %v1621 = vunpack.c.h.b16 %v1541
      %v1622 = vunpack.c.l.b16 %v1542
      %v1623 = vunpack.c.h.b16 %v1542
      %v1624 = vunpack.c.l.b16 %v1543
      %v1625 = vunpack.c.h.b16 %v1543
      %v1626 = vunpack.c.l.b16 %v1544
      %v1627 = vunpack.c.h.b16 %v1544
      %v1628 = vunpack.c.l.b16 %v1545
      %v1629 = vunpack.c.h.b16 %v1545
      %v1630 = vunpack.c.l.b16 %v1546
      %v1631 = vunpack.c.h.b16 %v1546
      %v1632 = vunpack.c.l.b16 %v1547
      %v1633 = vunpack.c.h.b16 %v1547
      %v1634 = vunpack.c.l.b16 %v1548
      %v1635 = vunpack.c.h.b16 %v1548
      %v1636 = vunpack.c.l.b16 %v1549
      %v1637 = vunpack.c.h.b16 %v1549
      %v1638 = vunpack.c.l.b16 %v1550
      %v1639 = vunpack.c.h.b16 %v1550
      %v1640 = vunpack.c.l.b16 %v1551
      %v1641 = vunpack.c.h.b16 %v1551
      %v1642 = vunpack.c.l.b16 %v1552
      %v1643 = vunpack.c.h.b16 %v1552
      %v1644 = vunpack.c.l.b16 %v1553
      %v1645 = vunpack.c.h.b16 %v1553
      %v1646 = vunpack.c.l.b16 %v1554
      %v1647 = vunpack.c.h.b16 %v1554
      %v1648 = vunpack.c.l.b16 %v1555
      %v1649 = vunpack.c.h.b16 %v1555
      %v1650 = vunpack.c.l.b16 %v1556
      %v1651 = vunpack.c.h.b16 %v1556
      %v1652 = vunpack.c.l.b16 %v1557
      %v1653 = vunpack.c.h.b16 %v1557
      %v1654 = vpack.c.b16 %v1590, %v1590
      %v1655 = vpack.c.b16 %v1591, %v1591
      %v1656 = vpack.c.b16 %v1592, %v1592
      %v1657 = vpack.c.b16 %v1593, %v1593
      %v1658 = vpack.c.b16 %v1594, %v1594
      %v1659 = vpack.c.b16 %v1595, %v1595
      %v1660 = vpack.c.b16 %v1596, %v1596
      %v1661 = vpack.c.b16 %v1597, %v1597
      %v1662 = vpack.c.b16 %v1598, %v1598
      %v1663 = vpack.c.b16 %v1599, %v1599
      %v1664 = vpack.c.b16 %v1600, %v1600
      %v1665 = vpack.c.b16 %v1601, %v1601
      %v1666 = vpack.c.b16 %v1602, %v1602
      %v1667 = vpack.c.b16 %v1603, %v1603
      %v1668 = vpack.c.b16 %v1604, %v1604
      %v1669 = vpack.c.b16 %v1605, %v1605
      %v1670 = vpack.c.b16 %v1606, %v1606
      %v1671 = vpack.c.b16 %v1607, %v1607
      %v1672 = vpack.c.b16 %v1608, %v1608
      %v1673 = vpack.c.b16 %v1609, %v1609
      %v1674 = vpack.c.b16 %v1610, %v1610
      %v1675 = vpack.c.b16 %v1611, %v1611
      %v1676 = vpack.c.b16 %v1612, %v1612
      %v1677 = vpack.c.b16 %v1613, %v1613
      %v1678 = vpack.c.b16 %v1614, %v1614
      %v1679 = vpack.c.b16 %v1615, %v1615
      %v1680 = vpack.c.b16 %v1616, %v1616
      %v1681 = vpack.c.b16 %v1617, %v1617
      %v1682 = vpack.c.b16 %v1618, %v1618
      %v1683 = vpack.c.b16 %v1619, %v1619
      %v1684 = vpack.c.b16 %v1620, %v1620
      %v1685 = vpack.c.b16 %v1621, %v1621
      %v1686 = vpack.c.b16 %v1622, %v1622
      %v1687 = vpack.c.b16 %v1623, %v1623
      %v1688 = vpack.c.b16 %v1624, %v1624
      %v1689 = vpack.c.b16 %v1625, %v1625
      %v1690 = vpack.c.b16 %v1626, %v1626
      %v1691 = vpack.c.b16 %v1627, %v1627
      %v1692 = vpack.c.b16 %v1628, %v1628
      %v1693 = vpack.c.b16 %v1629, %v1629
      %v1694 = vpack.c.b16 %v1630, %v1630
      %v1695 = vpack.c.b16 %v1631, %v1631
      %v1696 = vpack.c.b16 %v1632, %v1632
      %v1697 = vpack.c.b16 %v1633, %v1633
      %v1698 = vpack.c.b16 %v1634, %v1634
      %v1699 = vpack.c.b16 %v1635, %v1635
      %v1700 = vpack.c.b16 %v1636, %v1636
      %v1701 = vpack.c.b16 %v1637, %v1637
      %v1702 = vpack.c.b16 %v1638, %v1638
      %v1703 = vpack.c.b16 %v1639, %v1639
      %v1704 = vpack.c.b16 %v1640, %v1640
      %v1705 = vpack.c.b16 %v1641, %v1641
      %v1706 = vpack.c.b16 %v1642, %v1642
      %v1707 = vpack.c.b16 %v1643, %v1643
      %v1708 = vpack.c.b16 %v1644, %v1644
      %v1709 = vpack.c.b16 %v1645, %v1645
      %v1710 = vpack.c.b16 %v1646, %v1646
      %v1711 = vpack.c.b16 %v1647, %v1647
      %v1712 = vpack.c.b16 %v1648, %v1648
      %v1713 = vpack.c.b16 %v1649, %v1649
      %v1714 = vpack.c.b16 %v1650, %v1650
      %v1715 = vpack.c.b16 %v1651, %v1651
      %v1716 = vpack.c.b16 %v1652, %v1652
      %v1717 = vpack.c.b16 %v1653, %v1653
      %1782 = vst [vmem:[#allocation9] sm:$0xf] %v1654
      %1783 = vst [vmem:[#allocation9 + $0x4] sm:$0xf] %v1655
      %1784 = vst [vmem:[#allocation9 + $0x8] sm:$0xf] %v1656
      %1785 = vst [vmem:[#allocation9 + $0xc] sm:$0xf] %v1657
      %1786 = vst [vmem:[#allocation9 + $0x10] sm:$0xf] %v1658
      %1787 = vst [vmem:[#allocation9 + $0x14] sm:$0xf] %v1659
      %1788 = vst [vmem:[#allocation9 + $0x18] sm:$0xf] %v1660
      %1789 = vst [vmem:[#allocation9 + $0x1c] sm:$0xf] %v1661
      %1790 = vst [vmem:[#allocation9 + $0x20] sm:$0xf] %v1662
      %1791 = vst [vmem:[#allocation9 + $0x24] sm:$0xf] %v1663
      %1792 = vst [vmem:[#allocation9 + $0x28] sm:$0xf] %v1664
      %1793 = vst [vmem:[#allocation9 + $0x2c] sm:$0xf] %v1665
      %1794 = vst [vmem:[#allocation9 + $0x30] sm:$0xf] %v1666
      %1795 = vst [vmem:[#allocation9 + $0x34] sm:$0xf] %v1667
      %1796 = vst [vmem:[#allocation9 + $0x38] sm:$0xf] %v1668
      %1797 = vst [vmem:[#allocation9 + $0x3c] sm:$0xf] %v1669
      %1798 = vst [vmem:[#allocation9 + $0x40] sm:$0xf] %v1670
      %1799 = vst [vmem:[#allocation9 + $0x44] sm:$0xf] %v1671
      %1800 = vst [vmem:[#allocation9 + $0x48] sm:$0xf] %v1672
      %1801 = vst [vmem:[#allocation9 + $0x4c] sm:$0xf] %v1673
      %1802 = vst [vmem:[#allocation9 + $0x50] sm:$0xf] %v1674
      %1803 = vst [vmem:[#allocation9 + $0x54] sm:$0xf] %v1675
      %1804 = vst [vmem:[#allocation9 + $0x58] sm:$0xf] %v1676
      %1805 = vst [vmem:[#allocation9 + $0x5c] sm:$0xf] %v1677
      %1806 = vst [vmem:[#allocation9 + $0x60] sm:$0xf] %v1678
      %1807 = vst [vmem:[#allocation9 + $0x64] sm:$0xf] %v1679
      %1808 = vst [vmem:[#allocation9 + $0x68] sm:$0xf] %v1680
      %1809 = vst [vmem:[#allocation9 + $0x6c] sm:$0xf] %v1681
      %1810 = vst [vmem:[#allocation9 + $0x70] sm:$0xf] %v1682
      %1811 = vst [vmem:[#allocation9 + $0x74] sm:$0xf] %v1683
      %1812 = vst [vmem:[#allocation9 + $0x78] sm:$0xf] %v1684
      %1813 = vst [vmem:[#allocation9 + $0x7c] sm:$0xf] %v1685
      %1814 = vst [vmem:[#allocation9 + $0x80] sm:$0xf] %v1686
      %1815 = vst [vmem:[#allocation9 + $0x84] sm:$0xf] %v1687
      %1816 = vst [vmem:[#allocation9 + $0x88] sm:$0xf] %v1688
      %1817 = vst [vmem:[#allocation9 + $0x8c] sm:$0xf] %v1689
      %1818 = vst [vmem:[#allocation9 + $0x90] sm:$0xf] %v1690
      %1819 = vst [vmem:[#allocation9 + $0x94] sm:$0xf] %v1691
      %1820 = vst [vmem:[#allocation9 + $0x98] sm:$0xf] %v1692
      %1821 = vst [vmem:[#allocation9 + $0x9c] sm:$0xf] %v1693
      %1822 = vst [vmem:[#allocation9 + $0xa0] sm:$0xf] %v1694
      %1823 = vst [vmem:[#allocation9 + $0xa4] sm:$0xf] %v1695
      %1824 = vst [vmem:[#allocation9 + $0xa8] sm:$0xf] %v1696
      %1825 = vst [vmem:[#allocation9 + $0xac] sm:$0xf] %v1697
      %1826 = vst [vmem:[#allocation9 + $0xb0] sm:$0xf] %v1698
      %1827 = vst [vmem:[#allocation9 + $0xb4] sm:$0xf] %v1699
      %1828 = vst [vmem:[#allocation9 + $0xb8] sm:$0xf] %v1700
      %1829 = vst [vmem:[#allocation9 + $0xbc] sm:$0xf] %v1701
      %1830 = vst [vmem:[#allocation9 + $0xc0] sm:$0xf] %v1702
      %1831 = vst [vmem:[#allocation9 + $0xc4] sm:$0xf] %v1703
      %1832 = vst [vmem:[#allocation9 + $0xc8] sm:$0xf] %v1704
      %1833 = vst [vmem:[#allocation9 + $0xcc] sm:$0xf] %v1705
      %1834 = vst [vmem:[#allocation9 + $0xd0] sm:$0xf] %v1706
      %1835 = vst [vmem:[#allocation9 + $0xd4] sm:$0xf] %v1707
      %1836 = vst [vmem:[#allocation9 + $0xd8] sm:$0xf] %v1708
      %1837 = vst [vmem:[#allocation9 + $0xdc] sm:$0xf] %v1709
      %1838 = vst [vmem:[#allocation9 + $0xe0] sm:$0xf] %v1710
      %1839 = vst [vmem:[#allocation9 + $0xe4] sm:$0xf] %v1711
      %1840 = vst [vmem:[#allocation9 + $0xe8] sm:$0xf] %v1712
      %1841 = vst [vmem:[#allocation9 + $0xec] sm:$0xf] %v1713
      %1842 = vst [vmem:[#allocation9 + $0xf0] sm:$0xf] %v1714
      %1843 = vst [vmem:[#allocation9 + $0xf4] sm:$0xf] %v1715
      %1844 = vst [vmem:[#allocation9 + $0xf8] sm:$0xf] %v1716
      %1845 = vst [vmem:[#allocation9 + $0xfc] sm:$0xf] %v1717
    $region41: #{tpu_custom_call.1} parent=1 // pred_fallthru
      _
    // Predicated region
    $region42: #{tpu_custom_call.1} parent=1 // pred_check
      _
    $region43: #{tpu_custom_call.1} parent=1 // pred_check_branch
      %1847 = sbr.rel (0) target = $region45
    $region44: #{tpu_custom_call.1} parent=1 // pred_region
      %s1849 = ssub.s32 4096, 4096
      %1850 = vsyncadd [#allocation5], %s1849
      %s1851 = sshll.u32 [#allocation9], 4
      %s1852 = int_to_ptr.vmem [resolvable:$true] %s1851
      %1857 = dma.vmem_to_hbm [thread:$0]  %s1852, 4096, %s5, [#allocation5], 64, 64, 4
    $region45: #{tpu_custom_call.1} parent=1 // pred_fallthru
      _
    // Predicated region
    $region46: #{tpu_custom_call.1} parent=1 // pred_check
      _
    $region47: #{tpu_custom_call.1} parent=1 // pred_check_branch
      %1859 = sbr.rel (0) target = $region49
    $region48: #{tpu_custom_call.1} parent=1 // pred_region
      %1860 = dma.done [#allocation5], 4096
    $region49: #{tpu_custom_call.1} parent=1 // pred_fallthru
      _
    %1861 = vsyncpa [#allocation4], 1
    %1862 = vsyncpa [#allocation7], 1
    %1863 = vsyncpa [#allocation5], 1

</llo_original>
